<compile_context>
chip_gen: v7x
topology: tpu7x:2x2x1
jax: 0.10.0
libtpu: 0.0.40
codegen_flags: <defaults>
</compile_context>

<pallas_src>
import functools

import jax
import jax.numpy as jnp
from jax import lax
from jax.experimental import pallas as pl
from jax.experimental.pallas import tpu as pltpu

# -------------------- model hyper-parameters (small, deterministic) --------------------
N_HEAD = 4
D_MODEL = 32
D_HEAD = 8
QLEN = 8
RLEN = 8          # == klen (no mems)
BSZ = 2
LN_EPS = 1e-5
SCALE = 1.0 / (D_HEAD ** 0.5)


# ----------------------------- in-kernel relative shift --------------------------------
def _rel_shift_g(bd):
    """Exact torch `_rel_shift`, applied per (head, batch) slab of bd (G, Q, R), Q == R
    (both powers of two -- holds here since there are no mems).

    Closed form of the pad / reinterpret / drop-row trick for Q == R:
        out[i, j] = x[i, j + Q - 1 - i]   if j <= i
                  = 0                     if j == i + 1
                  = x[i + 1, j - i - 2]   if j >= i + 2

    Candidate A (per-row right rotation by i+1) is built from 3 conditional static
    rotations (bit decomposition) implemented as lane slice+concat (robust lowering for
    a sub-128-lane minor dim).  Candidate B (A shifted up one query row; the wrapped row
    is never selected) is a single pltpu.roll on the sublane axis.  No MXU, no
    precision emulation: the shift is bit-exact in f32.
    """
    g, q, r = bd.shape
    row = lax.broadcasted_iota(jnp.int32, (g, q, r), 1)     # query index i
    col = lax.broadcasted_iota(jnp.int32, (g, q, r), 2)     # key / rel index j
    amt = (row + 1) & (r - 1)                                # per-row right-rotation amount
    diff = col - row

    def rot_right(xv, k):                                    # xv[..., j] <- xv[..., (j-k) % r]
        return jnp.concatenate([xv[..., r - k:], xv[..., :r - k]], axis=-1)

    a = bd
    k = 1
    while k < r:
        a = jnp.where((amt & k) != 0, rot_right(a, k), a)
        k *= 2

    # b[g, i, :] = a[g, i+1, :]  (sublane roll; wrap row never selected below)
    b = pltpu.roll(a, shift=q - 1, axis=1)

    zero = jnp.zeros_like(bd)
    return jnp.where(diff <= 0, a, jnp.where(diff >= 2, b, zero))


# ------------------------------------ fused kernel -------------------------------------
def _rel_mha_kernel(q_len, r_len, n_head, d_head, scale, eps,
                    x_ref, wall_ref, wo_ref, bias_ref, ln_ref, o_ref):
    f32 = jnp.float32
    bf16 = jnp.bfloat16
    hd = n_head * d_head
    n = x_ref.shape[0] - r_len          # N = bsz * q_len, rows ordered (batch, query)
    bsz = n // q_len
    g = n_head * bsz

    x = x_ref[...]                      # (N + R, d_model) f32
    w2d = x[:n, :]                      # residual path stays exact f32

    # ---- fused qkv_net + r_net: ONE lane-dense bf16 MXU matmul -------------------------
    proj = jnp.dot(x.astype(bf16), wall_ref[...], preferred_element_type=f32)  # (N+R, 4*H*Dh)
    q2d = proj[:n, 0:hd]                # (N, H*Dh), columns ordered (head, d_head)
    k2d = proj[:n, hd:2 * hd]
    v2d = proj[:n, 2 * hd:3 * hd]
    rk2d = proj[n:, 3 * hd:4 * hd]      # (R, H*Dh)

    rw_q2d = q2d + bias_ref[0:1, :]     # + r_w_bias (lane-wise, head-major order matches)
    rr_q2d = q2d + bias_ref[1:2, :]     # + r_r_bias

    # ---- per-head batched layouts (static lane slices + leading-axis concats only) -----
    def heads_gb(x2):                   # (N, H*Dh) -> (G = H*B, Q, Dh), G ordered (h, b)
        return jnp.concatenate(
            [x2[:, h * d_head:(h + 1) * d_head].reshape(bsz, q_len, d_head)
             for h in range(n_head)], axis=0)

    def heads_h(x2, rows):              # (rows, H*Dh) -> (H, rows, Dh)
        return jnp.concatenate(
            [x2[:, h * d_head:(h + 1) * d_head].reshape(1, rows, d_head)
             for h in range(n_head)], axis=0)

    qg = heads_gb(rw_q2d).astype(bf16)        # (G, Q, Dh)
    kg = heads_gb(k2d).astype(bf16)
    vg = heads_gb(v2d).astype(bf16)
    rrh = heads_h(rr_q2d, n).astype(bf16)     # (H, N, Dh)
    rkh = heads_h(rk2d, r_len).astype(bf16)   # (H, R, Dh)

    # ---- AC / BD attention scores (bf16 MXU operands, f32 accumulation) ----------------
    ac = jnp.einsum('gqd,gkd->gqk', qg, kg, preferred_element_type=f32)     # (G, Q, K)
    bd = jnp.einsum('hnd,hrd->hnr', rrh, rkh, preferred_element_type=f32)   # (H, N, R)
    bd = _rel_shift_g(bd.reshape(g, q_len, r_len))                          # exact, f32

    # softmax over keys (no attn_mask / head_mask; dropatt = identity), f32 stats.
    s = (ac + bd) * scale
    s = s - jnp.max(s, axis=-1, keepdims=True)
    e = jnp.exp(s)
    p = e * pl.reciprocal(jnp.sum(e, axis=-1, keepdims=True), approx=True)

    # ---- attn_vec = P @ V ; fused o_net ; residual + post-LayerNorm --------------------
    av = jnp.einsum('gqk,gkd->gqd', p.astype(bf16), vg, preferred_element_type=f32)
    av3 = av.reshape(n_head, n, d_head)                                     # free reshape
    av2d = jnp.concatenate([av3[h] for h in range(n_head)], axis=-1)        # (N, H*Dh)
    attn_out = jnp.dot(av2d.astype(bf16), wo_ref[...], preferred_element_type=f32)

    xres = w2d + attn_out               # drop = identity (eval mode)
    mu = jnp.mean(xres, axis=-1, keepdims=True)
    xc = xres - mu
    var = jnp.mean(xc * xc, axis=-1, keepdims=True)
    o_ref[...] = xc * lax.rsqrt(var + eps) * ln_ref[0:1, :] + ln_ref[1:2, :]


# --------------------------------- glue / wrapper ---------------------------------------
def prepare_params(params):
    """One-time weight packing (outside the hot path):
         wall : (d_model, 4*H*Dh) bf16 = [Wq^T | Wk^T | Wv^T | Wr^T] (one fused projection)
         wo_t : (H*Dh, d_model)   bf16 = o_net weight, transposed
         bias : (2, H*Dh)         f32  = [r_w_bias ; r_r_bias] flattened (head-major)
         ln   : (2, d_model)      f32  = [gamma ; beta]
    """
    Wqkv, Wr, Wo, r_r_bias, r_w_bias, gamma, beta = params
    wall = jnp.concatenate([Wqkv.T, Wr.T], axis=1).astype(jnp.bfloat16)
    wo_t = Wo.T.astype(jnp.bfloat16)
    bias = jnp.stack([r_w_bias.reshape(-1), r_r_bias.reshape(-1)], axis=0)
    ln = jnp.stack([gamma, beta], axis=0)
    return (wall, wo_t, bias, ln)


@jax.jit
def rel_mha_pallas(w, r, prepped):
    """RelPartialLearnableMultiHeadAttn forward (pre_lnorm=False, no mems / attn_mask /
    head_mask; dropout, dropatt = identity).  One fused, grid-less Pallas kernel."""
    wall, wo_t, bias, ln = prepped
    q_len, bsz, dm = w.shape
    r_len = r.shape[0]
    assert r_len == q_len and (q_len & (q_len - 1)) == 0, \
        "in-kernel relative shift assumes rlen == qlen and a power-of-two length (no mems)"
    n = bsz * q_len
    w2d = w.transpose(1, 0, 2).reshape(n, dm)          # rows ordered (batch, query)
    xall = jnp.concatenate([w2d, r], axis=0)           # (N + R, d_model) -- one input DMA
    kernel = functools.partial(_rel_mha_kernel, q_len, r_len, N_HEAD, D_HEAD, SCALE, LN_EPS)
    cost = pl.CostEstimate(flops=320_000, transcendentals=600, bytes_accessed=20_000)
    out2d = pl.pallas_call(
        kernel,
        out_shape=jax.ShapeDtypeStruct((n, dm), jnp.float32),
        cost_estimate=cost,
    )(xall, wall, wo_t, bias, ln)
    return out2d.reshape(bsz, q_len, dm).transpose(1, 0, 2)


# ----------------------------- pure-JAX reference (torch semantics) ---------------------
def _rel_shift_ref(x):
    Q, R, B, H = x.shape
    zp = jnp.zeros((Q, 1, B, H), x.dtype)
    xp = jnp.concatenate([zp, x], axis=1)
    xp = xp.reshape(R + 1, Q, B, H)
    return xp[1:].reshape(Q, R, B, H)


def rel_mha_reference(w, r, params):
    Wqkv, Wr, Wo, r_r_bias, r_w_bias, gamma, beta = params
    Q, B, dm = w.shape
    R = r.shape[0]
    H, D = N_HEAD, D_HEAD
    w_heads = jnp.einsum('qbm,nm->qbn', w, Wqkv)
    r_head_k = r @ Wr.T
    q_h = w_heads[..., : H * D].reshape(Q, B, H, D)
    k_h = w_heads[..., H * D: 2 * H * D].reshape(Q, B, H, D)
    v_h = w_heads[..., 2 * H * D:].reshape(Q, B, H, D)
    r_k = r_head_k.reshape(R, H, D)
    AC = jnp.einsum('ibnd,jbnd->ijbn', q_h + r_w_bias, k_h)
    BD = jnp.einsum('ibnd,jnd->ijbn', q_h + r_r_bias, r_k)
    BD = _rel_shift_ref(BD)
    score = (AC + BD) * SCALE
    prob = jax.nn.softmax(score, axis=1)
    vec = jnp.einsum('ijbn,jbnd->ibnd', prob, v_h).reshape(Q, B, H * D)
    attn_out = vec @ Wo.T
    y = w + attn_out
    mu = jnp.mean(y, axis=-1, keepdims=True)
    var = jnp.mean((y - mu) ** 2, axis=-1, keepdims=True)
    return (y - mu) / jnp.sqrt(var + LN_EPS) * gamma + beta


# ------------------------------------------ main ----------------------------------------
if __name__ == "__main__":
    key = jax.random.PRNGKey(0)
    ks = jax.random.split(key, 9)

    # deterministic synthetic parameters (shapes per the module's __init__)
    Wqkv = 0.08 * jax.random.normal(ks[0], (3 * N_HEAD * D_HEAD, D_MODEL), jnp.float32)
    Wr = 0.08 * jax.random.normal(ks[1], (N_HEAD * D_HEAD, D_MODEL), jnp.float32)
    Wo = 0.08 * jax.random.normal(ks[2], (D_MODEL, N_HEAD * D_HEAD), jnp.float32)
    r_r_bias = 0.05 * jax.random.normal(ks[3], (N_HEAD, D_HEAD), jnp.float32)
    r_w_bias = 0.05 * jax.random.normal(ks[4], (N_HEAD, D_HEAD), jnp.float32)
    gamma = 1.0 + 0.1 * jax.random.normal(ks[5], (D_MODEL,), jnp.float32)
    beta = 0.1 * jax.random.normal(ks[6], (D_MODEL,), jnp.float32)
    params = (Wqkv, Wr, Wo, r_r_bias, r_w_bias, gamma, beta)

    # inputs
    w = jax.random.normal(ks[7], (QLEN, BSZ, D_MODEL), jnp.float32)
    r = jax.random.normal(ks[8], (RLEN, D_MODEL), jnp.float32)

    prepped = prepare_params(params)
    out = jax.block_until_ready(rel_mha_pallas(w, r, prepped))

    ref = jax.block_until_ready(rel_mha_reference(w, r, params))
    assert out.shape == (QLEN, BSZ, D_MODEL)
    err = float(jnp.max(jnp.abs(out - ref)))
    # tolerance covers bf16 MXU operands (f32 accumulation) + approx softmax reciprocal
    assert jnp.allclose(out, ref, atol=3e-2, rtol=3e-2), f"max abs err = {err}"

    print("KERNEL_OK")
</pallas_src>

<mosaic_0001>
module attributes {stable_mosaic.version = 11 : i64} {
  func.func @_rel_mha_kernel(%arg0: memref<24x32xf32, #tpu.memory_space<vmem>>, %arg1: memref<32x128xbf16, #tpu.memory_space<vmem>>, %arg2: memref<32x32xbf16, #tpu.memory_space<vmem>>, %arg3: memref<2x32xf32, #tpu.memory_space<vmem>>, %arg4: memref<2x32xf32, #tpu.memory_space<vmem>>, %arg5: memref<16x32xf32, #tpu.memory_space<vmem>>) attributes {dimension_semantics = [], scalar_prefetch = 0 : i64, scratch_operands = 0 : i64, tpu.core_type = #tpu.core_type<tc>} {
    %c0 = arith.constant 0 : index
    %c0_0 = arith.constant 0 : index
    %0 = vector.load %arg0[%c0, %c0_0] : memref<24x32xf32, #tpu.memory_space<vmem>>, vector<24x32xf32>
    %1 = vector.extract_strided_slice %0 {offsets = [0, 0], sizes = [16, 32], strides = [1, 1]} : vector<24x32xf32> to vector<16x32xf32>
    %2 = arith.truncf %0 : vector<24x32xf32> to vector<24x32xbf16>
    %c0_1 = arith.constant 0 : index
    %c0_2 = arith.constant 0 : index
    %3 = vector.load %arg1[%c0_1, %c0_2] : memref<32x128xbf16, #tpu.memory_space<vmem>>, vector<32x128xbf16>
    %cst = arith.constant dense<0.000000e+00> : vector<24x128xf32>
    %4 = tpu.matmul %2, %3, %cst {dimension_numbers = #tpu.dot_dimension_numbers<[1], [0], [0], [1], [0, 0, 1, 1], [], []>} : vector<24x32xbf16>, vector<32x128xbf16>, vector<24x128xf32> -> vector<24x128xf32>
    %5 = vector.extract_strided_slice %4 {offsets = [0, 0], sizes = [16, 32], strides = [1, 1]} : vector<24x128xf32> to vector<16x32xf32>
    %6 = vector.extract_strided_slice %4 {offsets = [0, 32], sizes = [16, 32], strides = [1, 1]} : vector<24x128xf32> to vector<16x32xf32>
    %7 = vector.extract_strided_slice %4 {offsets = [0, 64], sizes = [16, 32], strides = [1, 1]} : vector<24x128xf32> to vector<16x32xf32>
    %8 = vector.extract_strided_slice %4 {offsets = [16, 96], sizes = [8, 32], strides = [1, 1]} : vector<24x128xf32> to vector<8x32xf32>
    %c0_3 = arith.constant 0 : index
    %c0_4 = arith.constant 0 : index
    %9 = vector.load %arg3[%c0_3, %c0_4] : memref<2x32xf32, #tpu.memory_space<vmem>>, vector<1x32xf32>
    %10 = vector.broadcast %9 : vector<1x32xf32> to vector<16x32xf32>
    %11 = arith.addf %5, %10 : vector<16x32xf32>
    %c1 = arith.constant 1 : index
    %c0_5 = arith.constant 0 : index
    %12 = vector.load %arg3[%c1, %c0_5] : memref<2x32xf32, #tpu.memory_space<vmem>>, vector<1x32xf32>
    %13 = vector.broadcast %12 : vector<1x32xf32> to vector<16x32xf32>
    %14 = arith.addf %5, %13 : vector<16x32xf32>
    %15 = vector.extract_strided_slice %11 {offsets = [0, 0], sizes = [16, 8], strides = [1, 1]} : vector<16x32xf32> to vector<16x8xf32>
    %16 = vector.shape_cast %15 : vector<16x8xf32> to vector<2x8x8xf32>
    %17 = vector.extract_strided_slice %11 {offsets = [0, 8], sizes = [16, 8], strides = [1, 1]} : vector<16x32xf32> to vector<16x8xf32>
    %18 = vector.shape_cast %17 : vector<16x8xf32> to vector<2x8x8xf32>
    %19 = vector.extract_strided_slice %11 {offsets = [0, 16], sizes = [16, 8], strides = [1, 1]} : vector<16x32xf32> to vector<16x8xf32>
    %20 = vector.shape_cast %19 : vector<16x8xf32> to vector<2x8x8xf32>
    %21 = vector.extract_strided_slice %11 {offsets = [0, 24], sizes = [16, 8], strides = [1, 1]} : vector<16x32xf32> to vector<16x8xf32>
    %22 = vector.shape_cast %21 : vector<16x8xf32> to vector<2x8x8xf32>
    %23 = tpu.concatenate %16, %18, %20, %22 in 0 : vector<2x8x8xf32>, vector<2x8x8xf32>, vector<2x8x8xf32>, vector<2x8x8xf32> -> vector<8x8x8xf32>
    %24 = arith.truncf %23 : vector<8x8x8xf32> to vector<8x8x8xbf16>
    %25 = vector.extract_strided_slice %6 {offsets = [0, 0], sizes = [16, 8], strides = [1, 1]} : vector<16x32xf32> to vector<16x8xf32>
    %26 = vector.shape_cast %25 : vector<16x8xf32> to vector<2x8x8xf32>
    %27 = vector.extract_strided_slice %6 {offsets = [0, 8], sizes = [16, 8], strides = [1, 1]} : vector<16x32xf32> to vector<16x8xf32>
    %28 = vector.shape_cast %27 : vector<16x8xf32> to vector<2x8x8xf32>
    %29 = vector.extract_strided_slice %6 {offsets = [0, 16], sizes = [16, 8], strides = [1, 1]} : vector<16x32xf32> to vector<16x8xf32>
    %30 = vector.shape_cast %29 : vector<16x8xf32> to vector<2x8x8xf32>
    %31 = vector.extract_strided_slice %6 {offsets = [0, 24], sizes = [16, 8], strides = [1, 1]} : vector<16x32xf32> to vector<16x8xf32>
    %32 = vector.shape_cast %31 : vector<16x8xf32> to vector<2x8x8xf32>
    %33 = tpu.concatenate %26, %28, %30, %32 in 0 : vector<2x8x8xf32>, vector<2x8x8xf32>, vector<2x8x8xf32>, vector<2x8x8xf32> -> vector<8x8x8xf32>
    %34 = arith.truncf %33 : vector<8x8x8xf32> to vector<8x8x8xbf16>
    %35 = vector.extract_strided_slice %7 {offsets = [0, 0], sizes = [16, 8], strides = [1, 1]} : vector<16x32xf32> to vector<16x8xf32>
    %36 = vector.shape_cast %35 : vector<16x8xf32> to vector<2x8x8xf32>
    %37 = vector.extract_strided_slice %7 {offsets = [0, 8], sizes = [16, 8], strides = [1, 1]} : vector<16x32xf32> to vector<16x8xf32>
    %38 = vector.shape_cast %37 : vector<16x8xf32> to vector<2x8x8xf32>
    %39 = vector.extract_strided_slice %7 {offsets = [0, 16], sizes = [16, 8], strides = [1, 1]} : vector<16x32xf32> to vector<16x8xf32>
    %40 = vector.shape_cast %39 : vector<16x8xf32> to vector<2x8x8xf32>
    %41 = vector.extract_strided_slice %7 {offsets = [0, 24], sizes = [16, 8], strides = [1, 1]} : vector<16x32xf32> to vector<16x8xf32>
    %42 = vector.shape_cast %41 : vector<16x8xf32> to vector<2x8x8xf32>
    %43 = tpu.concatenate %36, %38, %40, %42 in 0 : vector<2x8x8xf32>, vector<2x8x8xf32>, vector<2x8x8xf32>, vector<2x8x8xf32> -> vector<8x8x8xf32>
    %44 = arith.truncf %43 : vector<8x8x8xf32> to vector<8x8x8xbf16>
    %45 = vector.extract_strided_slice %14 {offsets = [0, 0], sizes = [16, 8], strides = [1, 1]} : vector<16x32xf32> to vector<16x8xf32>
    %46 = vector.shape_cast %45 : vector<16x8xf32> to vector<1x16x8xf32>
    %47 = vector.extract_strided_slice %14 {offsets = [0, 8], sizes = [16, 8], strides = [1, 1]} : vector<16x32xf32> to vector<16x8xf32>
    %48 = vector.shape_cast %47 : vector<16x8xf32> to vector<1x16x8xf32>
    %49 = vector.extract_strided_slice %14 {offsets = [0, 16], sizes = [16, 8], strides = [1, 1]} : vector<16x32xf32> to vector<16x8xf32>
    %50 = vector.shape_cast %49 : vector<16x8xf32> to vector<1x16x8xf32>
    %51 = vector.extract_strided_slice %14 {offsets = [0, 24], sizes = [16, 8], strides = [1, 1]} : vector<16x32xf32> to vector<16x8xf32>
    %52 = vector.shape_cast %51 : vector<16x8xf32> to vector<1x16x8xf32>
    %53 = tpu.concatenate %46, %48, %50, %52 in 0 : vector<1x16x8xf32>, vector<1x16x8xf32>, vector<1x16x8xf32>, vector<1x16x8xf32> -> vector<4x16x8xf32>
    %54 = arith.truncf %53 : vector<4x16x8xf32> to vector<4x16x8xbf16>
    %55 = vector.extract_strided_slice %8 {offsets = [0, 0], sizes = [8, 8], strides = [1, 1]} : vector<8x32xf32> to vector<8x8xf32>
    %56 = vector.shape_cast %55 : vector<8x8xf32> to vector<1x8x8xf32>
    %57 = vector.extract_strided_slice %8 {offsets = [0, 8], sizes = [8, 8], strides = [1, 1]} : vector<8x32xf32> to vector<8x8xf32>
    %58 = vector.shape_cast %57 : vector<8x8xf32> to vector<1x8x8xf32>
    %59 = vector.extract_strided_slice %8 {offsets = [0, 16], sizes = [8, 8], strides = [1, 1]} : vector<8x32xf32> to vector<8x8xf32>
    %60 = vector.shape_cast %59 : vector<8x8xf32> to vector<1x8x8xf32>
    %61 = vector.extract_strided_slice %8 {offsets = [0, 24], sizes = [8, 8], strides = [1, 1]} : vector<8x32xf32> to vector<8x8xf32>
    %62 = vector.shape_cast %61 : vector<8x8xf32> to vector<1x8x8xf32>
    %63 = tpu.concatenate %56, %58, %60, %62 in 0 : vector<1x8x8xf32>, vector<1x8x8xf32>, vector<1x8x8xf32>, vector<1x8x8xf32> -> vector<4x8x8xf32>
    %64 = arith.truncf %63 : vector<4x8x8xf32> to vector<4x8x8xbf16>
    "tpu.trace_start"() <{level = 10 : i32, message = "gqd,gkd->gqk"}> : () -> ()
    %cst_6 = arith.constant dense<0.000000e+00> : vector<8x8x8xf32>
    %65 = tpu.matmul %24, %34, %cst_6 {dimension_numbers = #tpu.dot_dimension_numbers<[2], [2], [1], [1], [0, 0, 0, 1, 1, 1], [0], [0]>} : vector<8x8x8xbf16>, vector<8x8x8xbf16>, vector<8x8x8xf32> -> vector<8x8x8xf32>
    "tpu.trace_stop"() : () -> ()
    "tpu.trace_start"() <{level = 10 : i32, message = "hnd,hrd->hnr"}> : () -> ()
    %cst_7 = arith.constant dense<0.000000e+00> : vector<4x16x8xf32>
    %66 = tpu.matmul %54, %64, %cst_7 {dimension_numbers = #tpu.dot_dimension_numbers<[2], [2], [1], [1], [0, 0, 0, 1, 1, 1], [0], [0]>} : vector<4x16x8xbf16>, vector<4x8x8xbf16>, vector<4x16x8xf32> -> vector<4x16x8xf32>
    "tpu.trace_stop"() : () -> ()
    %67 = vector.shape_cast %66 : vector<4x16x8xf32> to vector<8x8x8xf32>
    %68 = tpu.iota {dimensions = array<i32: 1>} : vector<8x8x8xi32>
    %69 = tpu.iota {dimensions = array<i32: 2>} : vector<8x8x8xi32>
    %c1_i32 = arith.constant 1 : i32
    %70 = vector.broadcast %c1_i32 : i32 to vector<8x8x8xi32>
    %71 = arith.addi %68, %70 : vector<8x8x8xi32>
    %c7_i32 = arith.constant 7 : i32
    %72 = vector.broadcast %c7_i32 : i32 to vector<8x8x8xi32>
    %73 = arith.andi %71, %72 : vector<8x8x8xi32>
    %74 = arith.subi %69, %68 : vector<8x8x8xi32>
    %c1_i32_8 = arith.constant 1 : i32
    %75 = vector.broadcast %c1_i32_8 : i32 to vector<8x8x8xi32>
    %76 = arith.andi %73, %75 : vector<8x8x8xi32>
    %c0_i32 = arith.constant 0 : i32
    %77 = vector.broadcast %c0_i32 : i32 to vector<8x8x8xi32>
    %78 = arith.cmpi ne, %76, %77 : vector<8x8x8xi32>
    %79 = vector.extract_strided_slice %67 {offsets = [0, 0, 7], sizes = [8, 8, 1], strides = [1, 1, 1]} : vector<8x8x8xf32> to vector<8x8x1xf32>
    %80 = vector.extract_strided_slice %67 {offsets = [0, 0, 0], sizes = [8, 8, 7], strides = [1, 1, 1]} : vector<8x8x8xf32> to vector<8x8x7xf32>
    %81 = tpu.concatenate %79, %80 in 2 : vector<8x8x1xf32>, vector<8x8x7xf32> -> vector<8x8x8xf32>
    %82 = arith.select %78, %81, %67 : vector<8x8x8xi1>, vector<8x8x8xf32>
    %c2_i32 = arith.constant 2 : i32
    %83 = vector.broadcast %c2_i32 : i32 to vector<8x8x8xi32>
    %84 = arith.andi %73, %83 : vector<8x8x8xi32>
    %c0_i32_9 = arith.constant 0 : i32
    %85 = vector.broadcast %c0_i32_9 : i32 to vector<8x8x8xi32>
    %86 = arith.cmpi ne, %84, %85 : vector<8x8x8xi32>
    %87 = vector.extract_strided_slice %82 {offsets = [0, 0, 6], sizes = [8, 8, 2], strides = [1, 1, 1]} : vector<8x8x8xf32> to vector<8x8x2xf32>
    %88 = vector.extract_strided_slice %82 {offsets = [0, 0, 0], sizes = [8, 8, 6], strides = [1, 1, 1]} : vector<8x8x8xf32> to vector<8x8x6xf32>
    %89 = tpu.concatenate %87, %88 in 2 : vector<8x8x2xf32>, vector<8x8x6xf32> -> vector<8x8x8xf32>
    %90 = arith.select %86, %89, %82 : vector<8x8x8xi1>, vector<8x8x8xf32>
    %c4_i32 = arith.constant 4 : i32
    %91 = vector.broadcast %c4_i32 : i32 to vector<8x8x8xi32>
    %92 = arith.andi %73, %91 : vector<8x8x8xi32>
    %c0_i32_10 = arith.constant 0 : i32
    %93 = vector.broadcast %c0_i32_10 : i32 to vector<8x8x8xi32>
    %94 = arith.cmpi ne, %92, %93 : vector<8x8x8xi32>
    %95 = vector.extract_strided_slice %90 {offsets = [0, 0, 4], sizes = [8, 8, 4], strides = [1, 1, 1]} : vector<8x8x8xf32> to vector<8x8x4xf32>
    %96 = vector.extract_strided_slice %90 {offsets = [0, 0, 0], sizes = [8, 8, 4], strides = [1, 1, 1]} : vector<8x8x8xf32> to vector<8x8x4xf32>
    %97 = tpu.concatenate %95, %96 in 2 : vector<8x8x4xf32>, vector<8x8x4xf32> -> vector<8x8x8xf32>
    %98 = arith.select %94, %97, %90 : vector<8x8x8xi1>, vector<8x8x8xf32>
    %c7_i32_11 = arith.constant 7 : i32
    %99 = tpu.dynamic_rotate %98 by %c7_i32_11 dim 1 : vector<8x8x8xf32>, i32 -> vector<8x8x8xf32>
    %cst_12 = arith.constant 0.000000e+00 : f32
    %100 = vector.broadcast %cst_12 : f32 to vector<8x8x8xf32>
    %c0_i32_13 = arith.constant 0 : i32
    %101 = vector.broadcast %c0_i32_13 : i32 to vector<8x8x8xi32>
    %102 = arith.cmpi sle, %74, %101 : vector<8x8x8xi32>
    %c2_i32_14 = arith.constant 2 : i32
    %103 = vector.broadcast %c2_i32_14 : i32 to vector<8x8x8xi32>
    %104 = arith.cmpi sge, %74, %103 : vector<8x8x8xi32>
    %105 = arith.select %104, %99, %100 : vector<8x8x8xi1>, vector<8x8x8xf32>
    %106 = arith.select %102, %98, %105 : vector<8x8x8xi1>, vector<8x8x8xf32>
    %107 = arith.addf %65, %106 : vector<8x8x8xf32>
    %cst_15 = arith.constant 0.353553385 : f32
    %108 = vector.broadcast %cst_15 : f32 to vector<8x8x8xf32>
    %109 = arith.mulf %107, %108 : vector<8x8x8xf32>
    %cst_16 = arith.constant dense<0xFF800000> : vector<8x8xf32>
    %110 = vector.multi_reduction <maximumf>, %109, %cst_16 [2] : vector<8x8x8xf32> to vector<8x8xf32>
    %111 = vector.shape_cast %110 : vector<8x8xf32> to vector<8x8x1xf32>
    %112 = vector.broadcast %111 : vector<8x8x1xf32> to vector<8x8x8xf32>
    %113 = arith.subf %109, %112 : vector<8x8x8xf32>
    %114 = math.exp %113 : vector<8x8x8xf32>
    %cst_17 = arith.constant dense<0.000000e+00> : vector<8x8xf32>
    %115 = vector.multi_reduction <add>, %114, %cst_17 [2] : vector<8x8x8xf32> to vector<8x8xf32>
    %116 = vector.shape_cast %115 : vector<8x8xf32> to vector<8x8x1xf32>
    %117 = tpu.reciprocal %116 {approx = true} : vector<8x8x1xf32> -> vector<8x8x1xf32>
    %118 = vector.broadcast %117 : vector<8x8x1xf32> to vector<8x8x8xf32>
    %119 = arith.mulf %114, %118 : vector<8x8x8xf32>
    %120 = arith.truncf %119 : vector<8x8x8xf32> to vector<8x8x8xbf16>
    "tpu.trace_start"() <{level = 10 : i32, message = "gqk,gkd->gqd"}> : () -> ()
    %cst_18 = arith.constant dense<0.000000e+00> : vector<8x8x8xf32>
    %121 = tpu.matmul %120, %44, %cst_18 {dimension_numbers = #tpu.dot_dimension_numbers<[2], [1], [1], [2], [0, 0, 0, 1, 1, 2], [0], [0]>} : vector<8x8x8xbf16>, vector<8x8x8xbf16>, vector<8x8x8xf32> -> vector<8x8x8xf32>
    "tpu.trace_stop"() : () -> ()
    %122 = vector.shape_cast %121 : vector<8x8x8xf32> to vector<4x16x8xf32>
    %123 = vector.extract_strided_slice %122 {offsets = [0, 0, 0], sizes = [1, 16, 8], strides = [1, 1, 1]} : vector<4x16x8xf32> to vector<1x16x8xf32>
    %124 = vector.shape_cast %123 : vector<1x16x8xf32> to vector<16x8xf32>
    %125 = vector.extract_strided_slice %122 {offsets = [1, 0, 0], sizes = [1, 16, 8], strides = [1, 1, 1]} : vector<4x16x8xf32> to vector<1x16x8xf32>
    %126 = vector.shape_cast %125 : vector<1x16x8xf32> to vector<16x8xf32>
    %127 = vector.extract_strided_slice %122 {offsets = [2, 0, 0], sizes = [1, 16, 8], strides = [1, 1, 1]} : vector<4x16x8xf32> to vector<1x16x8xf32>
    %128 = vector.shape_cast %127 : vector<1x16x8xf32> to vector<16x8xf32>
    %129 = vector.extract_strided_slice %122 {offsets = [3, 0, 0], sizes = [1, 16, 8], strides = [1, 1, 1]} : vector<4x16x8xf32> to vector<1x16x8xf32>
    %130 = vector.shape_cast %129 : vector<1x16x8xf32> to vector<16x8xf32>
    %131 = tpu.concatenate %124, %126, %128, %130 in 1 : vector<16x8xf32>, vector<16x8xf32>, vector<16x8xf32>, vector<16x8xf32> -> vector<16x32xf32>
    %132 = arith.truncf %131 : vector<16x32xf32> to vector<16x32xbf16>
    %c0_19 = arith.constant 0 : index
    %c0_20 = arith.constant 0 : index
    %133 = vector.load %arg2[%c0_19, %c0_20] : memref<32x32xbf16, #tpu.memory_space<vmem>>, vector<32x32xbf16>
    %cst_21 = arith.constant dense<0.000000e+00> : vector<16x32xf32>
    %134 = tpu.matmul %132, %133, %cst_21 {dimension_numbers = #tpu.dot_dimension_numbers<[1], [0], [0], [1], [0, 0, 1, 1], [], []>} : vector<16x32xbf16>, vector<32x32xbf16>, vector<16x32xf32> -> vector<16x32xf32>
    %135 = arith.addf %1, %134 : vector<16x32xf32>
    %cst_22 = arith.constant dense<0.000000e+00> : vector<16xf32>
    %136 = vector.multi_reduction <add>, %135, %cst_22 [1] : vector<16x32xf32> to vector<16xf32>
    %137 = vector.shape_cast %136 : vector<16xf32> to vector<16x1xf32>
    %cst_23 = arith.constant 3.200000e+01 : f32
    %138 = vector.broadcast %cst_23 : f32 to vector<16x1xf32>
    %139 = arith.divf %137, %138 : vector<16x1xf32>
    %140 = vector.broadcast %139 : vector<16x1xf32> to vector<16x32xf32>
    %141 = arith.subf %135, %140 : vector<16x32xf32>
    %142 = arith.mulf %141, %141 : vector<16x32xf32>
    %cst_24 = arith.constant dense<0.000000e+00> : vector<16xf32>
    %143 = vector.multi_reduction <add>, %142, %cst_24 [1] : vector<16x32xf32> to vector<16xf32>
    %144 = vector.shape_cast %143 : vector<16xf32> to vector<16x1xf32>
    %cst_25 = arith.constant 3.200000e+01 : f32
    %145 = vector.broadcast %cst_25 : f32 to vector<16x1xf32>
    %146 = arith.divf %144, %145 : vector<16x1xf32>
    %cst_26 = arith.constant 9.99999974E-6 : f32
    %147 = vector.broadcast %cst_26 : f32 to vector<16x1xf32>
    %148 = arith.addf %146, %147 : vector<16x1xf32>
    %149 = math.rsqrt %148 : vector<16x1xf32>
    %150 = vector.broadcast %149 : vector<16x1xf32> to vector<16x32xf32>
    %151 = arith.mulf %141, %150 : vector<16x32xf32>
    %c0_27 = arith.constant 0 : index
    %c0_28 = arith.constant 0 : index
    %152 = vector.load %arg4[%c0_27, %c0_28] : memref<2x32xf32, #tpu.memory_space<vmem>>, vector<1x32xf32>
    %153 = vector.broadcast %152 : vector<1x32xf32> to vector<16x32xf32>
    %154 = arith.mulf %151, %153 : vector<16x32xf32>
    %c1_29 = arith.constant 1 : index
    %c0_30 = arith.constant 0 : index
    %155 = vector.load %arg4[%c1_29, %c0_30] : memref<2x32xf32, #tpu.memory_space<vmem>>, vector<1x32xf32>
    %156 = vector.broadcast %155 : vector<1x32xf32> to vector<16x32xf32>
    %157 = arith.addf %154, %156 : vector<16x32xf32>
    %c0_31 = arith.constant 0 : index
    %c0_32 = arith.constant 0 : index
    %158 = vector.load %arg5[%c0_31, %c0_32] : memref<16x32xf32, #tpu.memory_space<vmem>>, vector<16x32xf32>
    tpu.vector_store %arg5[%c0_31, %c0_32], %157 {strides = array<i32>} : memref<16x32xf32, #tpu.memory_space<vmem>>, vector<16x32xf32>,
    return
  }
}

</mosaic_0001>

<llo_original>
// kernel: rel_mha_pallas.1
$region0: #{rel_mha_pallas.1}
  #allocation0 [shape = 'u32[]', space=smem, size = 0x4, offset = 0x4, fixed_abs, tag = 'smem constant byte address 0x4 - core index']
  #allocation1 [shape = 'u32[144,128]{1,0:T(1,128)}', space=vmem, size = 0x12000, scoped, tag = 'internal scratch']
  %s0 = inlined_call_operand.vmem [shape: f32[24,32], index: 0, kind: input, shape index: {}]
  %s1 = inlined_call_operand.vmem [shape: bf16[32,128], index: 1, kind: input, shape index: {}]
  %s2 = inlined_call_operand.vmem [shape: bf16[32,32], index: 2, kind: input, shape index: {}]
  %s3 = inlined_call_operand.vmem [shape: f32[2,32], index: 3, kind: input, shape index: {}]
  %s4 = inlined_call_operand.vmem [shape: f32[2,32], index: 4, kind: input, shape index: {}]
  %s5 = inlined_call_operand.vmem [shape: f32[16,32], index: 5, kind: output, shape index: {}]
  %s6 = sld [smem:[#allocation0]]
  $region30: #{rel_mha_pallas.1} parent=0
    _
  %s8 = ssub.s32 1, %s6
  %s9 = scalar_select 0, %s8, %s6
  // Predicated region
  $region2: #{rel_mha_pallas.1} parent=0 // pred_check
    _
  $region3: #{rel_mha_pallas.1} parent=0 // pred_check_branch
    %11 = sbr.rel (0) target = $region5
  $region4: #{rel_mha_pallas.1} parent=0 // pred_region
    _
  $region5: #{rel_mha_pallas.1} parent=0 // pred_fallthru
    _
  // Predicated region
  $region6: #{rel_mha_pallas.1} parent=0 // pred_check
    _
  $region7: #{rel_mha_pallas.1} parent=0 // pred_check_branch
    %13 = sbr.rel (0) target = $region9
  $region8: #{rel_mha_pallas.1} parent=0 // pred_region
    _
  $region9: #{rel_mha_pallas.1} parent=0 // pred_fallthru
    _
  // Predicated region
  $region10: #{rel_mha_pallas.1} parent=0 // pred_check
    _
  $region11: #{rel_mha_pallas.1} parent=0 // pred_check_branch
    %15 = sbr.rel (0) target = $region13
  $region12: #{rel_mha_pallas.1} parent=0 // pred_region
    _
  $region13: #{rel_mha_pallas.1} parent=0 // pred_fallthru
    _
  // Predicated region
  $region14: #{rel_mha_pallas.1} parent=0 // pred_check
    _
  $region15: #{rel_mha_pallas.1} parent=0 // pred_check_branch
    %17 = sbr.rel (0) target = $region17
  $region16: #{rel_mha_pallas.1} parent=0 // pred_region
    _
  $region17: #{rel_mha_pallas.1} parent=0 // pred_fallthru
    _
  // Predicated region
  $region18: #{rel_mha_pallas.1} parent=0 // pred_check
    _
  $region19: #{rel_mha_pallas.1} parent=0 // pred_check_branch
    %19 = sbr.rel (0) target = $region21
  $region20: #{rel_mha_pallas.1} parent=0 // pred_region
    _
  $region21: #{rel_mha_pallas.1} parent=0 // pred_fallthru
    _
  %v21 = vld [vmem:[%s0] sm:$0xff]
  %v22 = vld [vmem:[%s0 + $0x8] sm:$0xff]
  %v23 = vld [vmem:[%s0 + $0x10] sm:$0xff]
  %v24 = vpack.c.bf16 %v22, %v21
  %v25 = vpack.c.bf16 %v23, %v23
  %v26 = vld [vmem:[%s1] sm:$0xf]
  %v27 = vld [vmem:[%s1 + $0x4] sm:$0xf]
  %v28 = vld [vmem:[%s1 + $0x8] sm:$0xf]
  %v29 = vld [vmem:[%s1 + $0xc] sm:$0xf]
  %v34 = vunpack.c.l.b16 %v26
  %v35 = vunpack.c.l.b16 %v27
  %v36 = vunpack.c.l.b16 %v28
  %v37 = vunpack.c.l.b16 %v29
  %v38 = vpack.c.b16 %v35, %v34
  %v39 = vpack.c.b16 %v37, %v36
  %vm42 = vcmask 261120
  %v44 = vsel %vm42, %v24, 0
  %v47 = vsel %vm42, %v25, 0
  %49 = vmatprep.subr.bf16.mxu0 0
  %50 = vmatpush1.bf16.msra.mxu0 %v38
  %51 = vmatprep.subr.bf16.mxu0 0
  %52 = vmatpush1.bf16.msra.mxu0 %v39
  %53 = vmatprep.subr.bf16.mxu0 0
  %54 = vmatpush1.bf16.msra.mxu0 0
  %55 = vmatprep.subr.bf16.mxu0 0
  %56 = vmatpush1.bf16.msra.mxu0 0
  %57 = vmatprep.subr.bf16.mxu0 0
  %58 = vmatpush1.bf16.msra.mxu0 0
  %59 = vmatprep.subr.bf16.mxu0 0
  %60 = vmatpush1.bf16.msra.mxu0 0
  %61 = vmatprep.subr.bf16.mxu0 0
  %62 = vmatpush1.bf16.msra.mxu0 0
  %63 = vmatprep.subr.bf16.mxu0 0
  %64 = vmatpush1.bf16.msra.mxu0 0
  %65 = vmatprep.subr.bf16.mxu0 0
  %66 = vmatpush1.bf16.msra.mxu0 0
  %67 = vmatprep.subr.bf16.mxu0 0
  %68 = vmatpush1.bf16.msra.mxu0 0
  %69 = vmatprep.subr.bf16.mxu0 0
  %70 = vmatpush1.bf16.msra.mxu0 0
  %71 = vmatprep.subr.bf16.mxu0 0
  %72 = vmatpush1.bf16.msra.mxu0 0
  %73 = vmatprep.subr.bf16.mxu0 0
  %74 = vmatpush1.bf16.msra.mxu0 0
  %75 = vmatprep.subr.bf16.mxu0 0
  %76 = vmatpush1.bf16.msra.mxu0 0
  %77 = vmatprep.subr.bf16.mxu0 0
  %78 = vmatpush1.bf16.msra.mxu0 0
  %79 = vmatprep.subr.bf16.mxu0 0
  %80 = vmatpush1.bf16.msra.mxu0 0
  %81 = vmatprep.mubr.bf16.mxu0 0
  %82 = vmatmul.mubr.bf16.gmra.mrb[0].mxu0 %v44
  %v83 = vpop.f32.mrb[0].mxu0
  %v84 = vadd.f32 0.0, %v83
  %v85 = vpop.f32.mrb[0].mxu0
  %v86 = vpop.f32.mrb[0].mxu0
  %v87 = vadd.f32 0.0, %v86
  %v88 = vpop.f32.mrb[0].mxu0
  %89 = vmatprep.mubr.bf16.mxu0 0
  %90 = vmatmul.mubr.bf16.gmra.mrb[0].mxu0 %v47
  %v91 = vpop.f32.mrb[0].mxu0
  %v92 = vadd.f32 0.0, %v91
  %v93 = vpop.f32.mrb[0].mxu0
  %v94 = vpop.f32.mrb[0].mxu0
  %v95 = vpop.f32.mrb[0].mxu0
  %96 = vdwg.mxu0
  %v97 = vld [vmem:[%s3] sm:$0x1]
  %v98 = vlaneseq
  %v99 = vshrl.u32 %v98, 7
  %v100 = vsub.s32 0, %v99
  %v101 = vrot.slane %v97, %v100
  %v102 = vadd.f32 %v84, %v101
  %v103 = vadd.f32 %v87, %v101
  %v104 = vld [vmem:[%s3 + $0x1] sm:$0x1]
  %v105 = vlaneseq
  %v106 = vshrl.u32 %v105, 7
  %v107 = vsub.s32 0, %v106
  %v108 = vrot.slane %v104, %v107
  %v109 = vadd.f32 %v84, %v108
  %v110 = vadd.f32 %v87, %v108
  %113 = vrot.lane.b32.xlu0 %v102, 120
  %v114 = vpop.permute.xlu0 %113
  %115 = vrot.lane.b32.xlu0 %v103, 120
  %v116 = vpop.permute.xlu0 %115
  %119 = vrot.lane.b32.xlu0 %v102, 112
  %v120 = vpop.permute.xlu0 %119
  %121 = vrot.lane.b32.xlu0 %v103, 112
  %v122 = vpop.permute.xlu0 %121
  %125 = vrot.lane.b32.xlu0 %v102, 104
  %v126 = vpop.permute.xlu0 %125
  %127 = vrot.lane.b32.xlu0 %v103, 104
  %v128 = vpop.permute.xlu0 %127
  %v131 = vpack.c.bf16 %v102, %v102
  %v132 = vpack.c.bf16 %v103, %v103
  %v133 = vpack.c.bf16 %v114, %v114
  %v134 = vpack.c.bf16 %v116, %v116
  %v135 = vpack.c.bf16 %v120, %v120
  %v136 = vpack.c.bf16 %v122, %v122
  %v137 = vpack.c.bf16 %v126, %v126
  %v138 = vpack.c.bf16 %v128, %v128
  %141 = vrot.lane.b32.xlu0 %v84, 120
  %v142 = vpop.permute.xlu0 %141
  %143 = vrot.lane.b32.xlu0 %v87, 120
  %v144 = vpop.permute.xlu0 %143
  %147 = vrot.lane.b32.xlu0 %v84, 112
  %v148 = vpop.permute.xlu0 %147
  %149 = vrot.lane.b32.xlu0 %v87, 112
  %v150 = vpop.permute.xlu0 %149
  %153 = vrot.lane.b32.xlu0 %v84, 104
  %v154 = vpop.permute.xlu0 %153
  %155 = vrot.lane.b32.xlu0 %v87, 104
  %v156 = vpop.permute.xlu0 %155
  %v159 = vpack.c.bf16 %v84, %v84
  %v160 = vpack.c.bf16 %v87, %v87
  %v161 = vpack.c.bf16 %v142, %v142
  %v162 = vpack.c.bf16 %v144, %v144
  %v163 = vpack.c.bf16 %v148, %v148
  %v164 = vpack.c.bf16 %v150, %v150
  %v165 = vpack.c.bf16 %v154, %v154
  %v166 = vpack.c.bf16 %v156, %v156
  %169 = vrot.lane.b32.xlu0 %v109, 120
  %v170 = vpop.permute.xlu0 %169
  %171 = vrot.lane.b32.xlu0 %v110, 120
  %v172 = vpop.permute.xlu0 %171
  %175 = vrot.lane.b32.xlu0 %v109, 112
  %v176 = vpop.permute.xlu0 %175
  %177 = vrot.lane.b32.xlu0 %v110, 112
  %v178 = vpop.permute.xlu0 %177
  %181 = vrot.lane.b32.xlu0 %v109, 104
  %v182 = vpop.permute.xlu0 %181
  %183 = vrot.lane.b32.xlu0 %v110, 104
  %v184 = vpop.permute.xlu0 %183
  %v187 = vpack.c.bf16 %v110, %v109
  %v188 = vpack.c.bf16 %v172, %v170
  %v189 = vpack.c.bf16 %v178, %v176
  %v190 = vpack.c.bf16 %v184, %v182
  %192 = vrot.lane.b32.xlu0 %v92, 120
  %v193 = vpop.permute.xlu0 %192
  %195 = vrot.lane.b32.xlu0 %v92, 112
  %v196 = vpop.permute.xlu0 %195
  %198 = vrot.lane.b32.xlu0 %v92, 104
  %v199 = vpop.permute.xlu0 %198
  %v201 = vpack.c.bf16 %v92, %v92
  %v202 = vpack.c.bf16 %v193, %v193
  %v203 = vpack.c.bf16 %v196, %v196
  %v204 = vpack.c.bf16 %v199, %v199
  %206 = vrot.lane.b32.xlu0 %v201, 32
  %v207 = vpop.permute.xlu0 %206
  %vm208 = vcmask 64512
  %v210 = vsel %vm208, %v187, 0
  %v213 = vsel %vm208, %v207, 0
  %215 = vmatprep.subr.bf16.mxu0 0
  %216 = vmatpush1.bf16.xpose.msra.mxu0 %v213
  %217 = vmatprep.subr.bf16.mxu0 0
  %218 = vmatpush1.bf16.xpose.msra.mxu0 0
  %219 = vmatprep.subr.bf16.mxu0 0
  %220 = vmatpush1.bf16.xpose.msra.mxu0 0
  %221 = vmatprep.subr.bf16.mxu0 0
  %222 = vmatpush1.bf16.xpose.msra.mxu0 0
  %223 = vmatprep.subr.bf16.mxu0 0
  %224 = vmatpush1.bf16.xpose.msra.mxu0 0
  %225 = vmatprep.subr.bf16.mxu0 0
  %226 = vmatpush1.bf16.xpose.msra.mxu0 0
  %227 = vmatprep.subr.bf16.mxu0 0
  %228 = vmatpush1.bf16.xpose.msra.mxu0 0
  %229 = vmatprep.subr.bf16.mxu0 0
  %230 = vmatpush1.bf16.xpose.msra.mxu0 0
  %231 = vmatprep.subr.bf16.mxu0 0
  %232 = vmatpush1.bf16.xpose.msra.mxu0 0
  %233 = vmatprep.subr.bf16.mxu0 0
  %234 = vmatpush1.bf16.xpose.msra.mxu0 0
  %235 = vmatprep.subr.bf16.mxu0 0
  %236 = vmatpush1.bf16.xpose.msra.mxu0 0
  %237 = vmatprep.subr.bf16.mxu0 0
  %238 = vmatpush1.bf16.xpose.msra.mxu0 0
  %239 = vmatprep.subr.bf16.mxu0 0
  %240 = vmatpush1.bf16.xpose.msra.mxu0 0
  %241 = vmatprep.subr.bf16.mxu0 0
  %242 = vmatpush1.bf16.xpose.msra.mxu0 0
  %243 = vmatprep.subr.bf16.mxu0 0
  %244 = vmatpush1.bf16.xpose.msra.mxu0 0
  %245 = vmatprep.subr.bf16.mxu0 0
  %246 = vmatpush1.bf16.xpose.msra.mxu0 0
  %247 = vmatprep.mubr.bf16.mxu0 0
  %248 = vmatmul.mubr.bf16.gmra.mrb[0].mxu0 %v210
  %v249 = vpop.f32.mrb[0].mxu0
  %v250 = vadd.f32 0.0, %v249
  %v251 = vpop.f32.mrb[0].mxu0
  %v252 = vpop.f32.mrb[0].mxu0
  %v253 = vadd.f32 0.0, %v252
  %v254 = vpop.f32.mrb[0].mxu0
  %255 = vdwg.mxu0
  %257 = vrot.lane.b32.xlu0 %v202, 32
  %v258 = vpop.permute.xlu0 %257
  %v260 = vsel %vm208, %v188, 0
  %v263 = vsel %vm208, %v258, 0
  %265 = vmatprep.subr.bf16.mxu0 0
  %266 = vmatpush1.bf16.xpose.msra.mxu0 %v263
  %267 = vmatprep.subr.bf16.mxu0 0
  %268 = vmatpush1.bf16.xpose.msra.mxu0 0
  %269 = vmatprep.subr.bf16.mxu0 0
  %270 = vmatpush1.bf16.xpose.msra.mxu0 0
  %271 = vmatprep.subr.bf16.mxu0 0
  %272 = vmatpush1.bf16.xpose.msra.mxu0 0
  %273 = vmatprep.subr.bf16.mxu0 0
  %274 = vmatpush1.bf16.xpose.msra.mxu0 0
  %275 = vmatprep.subr.bf16.mxu0 0
  %276 = vmatpush1.bf16.xpose.msra.mxu0 0
  %277 = vmatprep.subr.bf16.mxu0 0
  %278 = vmatpush1.bf16.xpose.msra.mxu0 0
  %279 = vmatprep.subr.bf16.mxu0 0
  %280 = vmatpush1.bf16.xpose.msra.mxu0 0
  %281 = vmatprep.subr.bf16.mxu0 0
  %282 = vmatpush1.bf16.xpose.msra.mxu0 0
  %283 = vmatprep.subr.bf16.mxu0 0
  %284 = vmatpush1.bf16.xpose.msra.mxu0 0
  %285 = vmatprep.subr.bf16.mxu0 0
  %286 = vmatpush1.bf16.xpose.msra.mxu0 0
  %287 = vmatprep.subr.bf16.mxu0 0
  %288 = vmatpush1.bf16.xpose.msra.mxu0 0
  %289 = vmatprep.subr.bf16.mxu0 0
  %290 = vmatpush1.bf16.xpose.msra.mxu0 0
  %291 = vmatprep.subr.bf16.mxu0 0
  %292 = vmatpush1.bf16.xpose.msra.mxu0 0
  %293 = vmatprep.subr.bf16.mxu0 0
  %294 = vmatpush1.bf16.xpose.msra.mxu0 0
  %295 = vmatprep.subr.bf16.mxu0 0
  %296 = vmatpush1.bf16.xpose.msra.mxu0 0
  %297 = vmatprep.mubr.bf16.mxu0 0
  %298 = vmatmul.mubr.bf16.gmra.mrb[0].mxu0 %v260
  %v299 = vpop.f32.mrb[0].mxu0
  %v300 = vadd.f32 0.0, %v299
  %v301 = vpop.f32.mrb[0].mxu0
  %v302 = vpop.f32.mrb[0].mxu0
  %v303 = vadd.f32 0.0, %v302
  %v304 = vpop.f32.mrb[0].mxu0
  %305 = vdwg.mxu0
  %307 = vrot.lane.b32.xlu0 %v203, 32
  %v308 = vpop.permute.xlu0 %307
  %v310 = vsel %vm208, %v189, 0
  %v313 = vsel %vm208, %v308, 0
  %315 = vmatprep.subr.bf16.mxu0 0
  %316 = vmatpush1.bf16.xpose.msra.mxu0 %v313
  %317 = vmatprep.subr.bf16.mxu0 0
  %318 = vmatpush1.bf16.xpose.msra.mxu0 0
  %319 = vmatprep.subr.bf16.mxu0 0
  %320 = vmatpush1.bf16.xpose.msra.mxu0 0
  %321 = vmatprep.subr.bf16.mxu0 0
  %322 = vmatpush1.bf16.xpose.msra.mxu0 0
  %323 = vmatprep.subr.bf16.mxu0 0
  %324 = vmatpush1.bf16.xpose.msra.mxu0 0
  %325 = vmatprep.subr.bf16.mxu0 0
  %326 = vmatpush1.bf16.xpose.msra.mxu0 0
  %327 = vmatprep.subr.bf16.mxu0 0
  %328 = vmatpush1.bf16.xpose.msra.mxu0 0
  %329 = vmatprep.subr.bf16.mxu0 0
  %330 = vmatpush1.bf16.xpose.msra.mxu0 0
  %331 = vmatprep.subr.bf16.mxu0 0
  %332 = vmatpush1.bf16.xpose.msra.mxu0 0
  %333 = vmatprep.subr.bf16.mxu0 0
  %334 = vmatpush1.bf16.xpose.msra.mxu0 0
  %335 = vmatprep.subr.bf16.mxu0 0
  %336 = vmatpush1.bf16.xpose.msra.mxu0 0
  %337 = vmatprep.subr.bf16.mxu0 0
  %338 = vmatpush1.bf16.xpose.msra.mxu0 0
  %339 = vmatprep.subr.bf16.mxu0 0
  %340 = vmatpush1.bf16.xpose.msra.mxu0 0
  %341 = vmatprep.subr.bf16.mxu0 0
  %342 = vmatpush1.bf16.xpose.msra.mxu0 0
  %343 = vmatprep.subr.bf16.mxu0 0
  %344 = vmatpush1.bf16.xpose.msra.mxu0 0
  %345 = vmatprep.subr.bf16.mxu0 0
  %346 = vmatpush1.bf16.xpose.msra.mxu0 0
  %347 = vmatprep.mubr.bf16.mxu0 0
  %348 = vmatmul.mubr.bf16.gmra.mrb[0].mxu0 %v310
  %v349 = vpop.f32.mrb[0].mxu0
  %v350 = vadd.f32 0.0, %v349
  %v351 = vpop.f32.mrb[0].mxu0
  %v352 = vpop.f32.mrb[0].mxu0
  %v353 = vadd.f32 0.0, %v352
  %v354 = vpop.f32.mrb[0].mxu0
  %355 = vdwg.mxu0
  %357 = vrot.lane.b32.xlu0 %v204, 32
  %v358 = vpop.permute.xlu0 %357
  %v360 = vsel %vm208, %v190, 0
  %v363 = vsel %vm208, %v358, 0
  %365 = vmatprep.subr.bf16.mxu0 0
  %366 = vmatpush1.bf16.xpose.msra.mxu0 %v363
  %367 = vmatprep.subr.bf16.mxu0 0
  %368 = vmatpush1.bf16.xpose.msra.mxu0 0
  %369 = vmatprep.subr.bf16.mxu0 0
  %370 = vmatpush1.bf16.xpose.msra.mxu0 0
  %371 = vmatprep.subr.bf16.mxu0 0
  %372 = vmatpush1.bf16.xpose.msra.mxu0 0
  %373 = vmatprep.subr.bf16.mxu0 0
  %374 = vmatpush1.bf16.xpose.msra.mxu0 0
  %375 = vmatprep.subr.bf16.mxu0 0
  %376 = vmatpush1.bf16.xpose.msra.mxu0 0
  %377 = vmatprep.subr.bf16.mxu0 0
  %378 = vmatpush1.bf16.xpose.msra.mxu0 0
  %379 = vmatprep.subr.bf16.mxu0 0
  %380 = vmatpush1.bf16.xpose.msra.mxu0 0
  %381 = vmatprep.subr.bf16.mxu0 0
  %382 = vmatpush1.bf16.xpose.msra.mxu0 0
  %383 = vmatprep.subr.bf16.mxu0 0
  %384 = vmatpush1.bf16.xpose.msra.mxu0 0
  %385 = vmatprep.subr.bf16.mxu0 0
  %386 = vmatpush1.bf16.xpose.msra.mxu0 0
  %387 = vmatprep.subr.bf16.mxu0 0
  %388 = vmatpush1.bf16.xpose.msra.mxu0 0
  %389 = vmatprep.subr.bf16.mxu0 0
  %390 = vmatpush1.bf16.xpose.msra.mxu0 0
  %391 = vmatprep.subr.bf16.mxu0 0
  %392 = vmatpush1.bf16.xpose.msra.mxu0 0
  %393 = vmatprep.subr.bf16.mxu0 0
  %394 = vmatpush1.bf16.xpose.msra.mxu0 0
  %395 = vmatprep.subr.bf16.mxu0 0
  %396 = vmatpush1.bf16.xpose.msra.mxu0 0
  %397 = vmatprep.mubr.bf16.mxu0 0
  %398 = vmatmul.mubr.bf16.gmra.mrb[0].mxu0 %v360
  %v399 = vpop.f32.mrb[0].mxu0
  %v400 = vadd.f32 0.0, %v399
  %v401 = vpop.f32.mrb[0].mxu0
  %v402 = vpop.f32.mrb[0].mxu0
  %v403 = vadd.f32 0.0, %v402
  %v404 = vpop.f32.mrb[0].mxu0
  %405 = vdwg.mxu0
  %v406 = vlaneseq
  %v407 = vshrl.u32 %v406, 7
  %v408 = vlaneseq
  %v409 = vand.u32 %v408, 127
  %v410 = vadd.s32 %v407, 1
  %v411 = vand.u32 %v410, 7
  %v412 = vsub.s32 %v409, %v407
  %v413 = vand.u32 %v411, 1
  %vm414 = vcmp.ne.s32.totalorder %v413, 0
  %423 = vrot.lane.b32.xlu0 %v250, 121
  %v424 = vpop.permute.xlu0 %423
  %425 = vrot.lane.b32.xlu0 %v253, 121
  %v426 = vpop.permute.xlu0 %425
  %427 = vrot.lane.b32.xlu0 %v300, 121
  %v428 = vpop.permute.xlu0 %427
  %429 = vrot.lane.b32.xlu0 %v303, 121
  %v430 = vpop.permute.xlu0 %429
  %431 = vrot.lane.b32.xlu0 %v350, 121
  %v432 = vpop.permute.xlu0 %431
  %433 = vrot.lane.b32.xlu0 %v353, 121
  %v434 = vpop.permute.xlu0 %433
  %435 = vrot.lane.b32.xlu0 %v400, 121
  %v436 = vpop.permute.xlu0 %435
  %437 = vrot.lane.b32.xlu0 %v403, 121
  %v438 = vpop.permute.xlu0 %437
  %447 = vrot.lane.b32.xlu0 %v250, 1
  %v448 = vpop.permute.xlu0 %447
  %449 = vrot.lane.b32.xlu0 %v253, 1
  %v450 = vpop.permute.xlu0 %449
  %451 = vrot.lane.b32.xlu0 %v300, 1
  %v452 = vpop.permute.xlu0 %451
  %453 = vrot.lane.b32.xlu0 %v303, 1
  %v454 = vpop.permute.xlu0 %453
  %455 = vrot.lane.b32.xlu0 %v350, 1
  %v456 = vpop.permute.xlu0 %455
  %457 = vrot.lane.b32.xlu0 %v353, 1
  %v458 = vpop.permute.xlu0 %457
  %459 = vrot.lane.b32.xlu0 %v400, 1
  %v460 = vpop.permute.xlu0 %459
  %461 = vrot.lane.b32.xlu0 %v403, 1
  %v462 = vpop.permute.xlu0 %461
  %vm471 = vcmask 7168
  %v472 = vsel %vm471, %v424, %v448
  %v473 = vsel %vm471, %v426, %v450
  %v474 = vsel %vm471, %v428, %v452
  %v475 = vsel %vm471, %v430, %v454
  %v476 = vsel %vm471, %v432, %v456
  %v477 = vsel %vm471, %v434, %v458
  %v478 = vsel %vm471, %v436, %v460
  %v479 = vsel %vm471, %v438, %v462
  %v480 = vsel %vm414, %v472, %v250
  %v481 = vsel %vm414, %v473, %v253
  %v482 = vsel %vm414, %v474, %v300
  %v483 = vsel %vm414, %v475, %v303
  %v484 = vsel %vm414, %v476, %v350
  %v485 = vsel %vm414, %v477, %v353
  %v486 = vsel %vm414, %v478, %v400
  %v487 = vsel %vm414, %v479, %v403
  %v488 = vand.u32 %v411, 2
  %vm489 = vcmp.ne.s32.totalorder %v488, 0
  %498 = vrot.lane.b32.xlu0 %v480, 122
  %v499 = vpop.permute.xlu0 %498
  %500 = vrot.lane.b32.xlu0 %v481, 122
  %v501 = vpop.permute.xlu0 %500
  %502 = vrot.lane.b32.xlu0 %v482, 122
  %v503 = vpop.permute.xlu0 %502
  %504 = vrot.lane.b32.xlu0 %v483, 122
  %v505 = vpop.permute.xlu0 %504
  %506 = vrot.lane.b32.xlu0 %v484, 122
  %v507 = vpop.permute.xlu0 %506
  %508 = vrot.lane.b32.xlu0 %v485, 122
  %v509 = vpop.permute.xlu0 %508
  %510 = vrot.lane.b32.xlu0 %v486, 122
  %v511 = vpop.permute.xlu0 %510
  %512 = vrot.lane.b32.xlu0 %v487, 122
  %v513 = vpop.permute.xlu0 %512
  %522 = vrot.lane.b32.xlu0 %v480, 2
  %v523 = vpop.permute.xlu0 %522
  %524 = vrot.lane.b32.xlu0 %v481, 2
  %v525 = vpop.permute.xlu0 %524
  %526 = vrot.lane.b32.xlu0 %v482, 2
  %v527 = vpop.permute.xlu0 %526
  %528 = vrot.lane.b32.xlu0 %v483, 2
  %v529 = vpop.permute.xlu0 %528
  %530 = vrot.lane.b32.xlu0 %v484, 2
  %v531 = vpop.permute.xlu0 %530
  %532 = vrot.lane.b32.xlu0 %v485, 2
  %v533 = vpop.permute.xlu0 %532
  %534 = vrot.lane.b32.xlu0 %v486, 2
  %v535 = vpop.permute.xlu0 %534
  %536 = vrot.lane.b32.xlu0 %v487, 2
  %v537 = vpop.permute.xlu0 %536
  %vm546 = vcmask 15360
  %v547 = vsel %vm546, %v499, %v523
  %v548 = vsel %vm546, %v501, %v525
  %v549 = vsel %vm546, %v503, %v527
  %v550 = vsel %vm546, %v505, %v529
  %v551 = vsel %vm546, %v507, %v531
  %v552 = vsel %vm546, %v509, %v533
  %v553 = vsel %vm546, %v511, %v535
  %v554 = vsel %vm546, %v513, %v537
  %v555 = vsel %vm489, %v547, %v480
  %v556 = vsel %vm489, %v548, %v481
  %v557 = vsel %vm489, %v549, %v482
  %v558 = vsel %vm489, %v550, %v483
  %v559 = vsel %vm489, %v551, %v484
  %v560 = vsel %vm489, %v552, %v485
  %v561 = vsel %vm489, %v553, %v486
  %v562 = vsel %vm489, %v554, %v487
  %v563 = vand.u32 %v411, 4
  %vm564 = vcmp.ne.s32.totalorder %v563, 0
  %573 = vrot.lane.b32.xlu0 %v555, 124
  %v574 = vpop.permute.xlu0 %573
  %575 = vrot.lane.b32.xlu0 %v556, 124
  %v576 = vpop.permute.xlu0 %575
  %577 = vrot.lane.b32.xlu0 %v557, 124
  %v578 = vpop.permute.xlu0 %577
  %579 = vrot.lane.b32.xlu0 %v558, 124
  %v580 = vpop.permute.xlu0 %579
  %581 = vrot.lane.b32.xlu0 %v559, 124
  %v582 = vpop.permute.xlu0 %581
  %583 = vrot.lane.b32.xlu0 %v560, 124
  %v584 = vpop.permute.xlu0 %583
  %585 = vrot.lane.b32.xlu0 %v561, 124
  %v586 = vpop.permute.xlu0 %585
  %587 = vrot.lane.b32.xlu0 %v562, 124
  %v588 = vpop.permute.xlu0 %587
  %597 = vrot.lane.b32.xlu0 %v555, 4
  %v598 = vpop.permute.xlu0 %597
  %599 = vrot.lane.b32.xlu0 %v556, 4
  %v600 = vpop.permute.xlu0 %599
  %601 = vrot.lane.b32.xlu0 %v557, 4
  %v602 = vpop.permute.xlu0 %601
  %603 = vrot.lane.b32.xlu0 %v558, 4
  %v604 = vpop.permute.xlu0 %603
  %605 = vrot.lane.b32.xlu0 %v559, 4
  %v606 = vpop.permute.xlu0 %605
  %607 = vrot.lane.b32.xlu0 %v560, 4
  %v608 = vpop.permute.xlu0 %607
  %609 = vrot.lane.b32.xlu0 %v561, 4
  %v610 = vpop.permute.xlu0 %609
  %611 = vrot.lane.b32.xlu0 %v562, 4
  %v612 = vpop.permute.xlu0 %611
  %vm621 = vcmask 31744
  %v622 = vsel %vm621, %v574, %v598
  %v623 = vsel %vm621, %v576, %v600
  %v624 = vsel %vm621, %v578, %v602
  %v625 = vsel %vm621, %v580, %v604
  %v626 = vsel %vm621, %v582, %v606
  %v627 = vsel %vm621, %v584, %v608
  %v628 = vsel %vm621, %v586, %v610
  %v629 = vsel %vm621, %v588, %v612
  %v630 = vsel %vm564, %v622, %v555
  %v631 = vsel %vm564, %v623, %v556
  %v632 = vsel %vm564, %v624, %v557
  %v633 = vsel %vm564, %v625, %v558
  %v634 = vsel %vm564, %v626, %v559
  %v635 = vsel %vm564, %v627, %v560
  %v636 = vsel %vm564, %v628, %v561
  %v637 = vsel %vm564, %v629, %v562
  %v638 = vrot.slane %v630, 1
  %v639 = vrot.slane %v631, 1
  %v640 = vrot.slane %v632, 1
  %v641 = vrot.slane %v633, 1
  %v642 = vrot.slane %v634, 1
  %v643 = vrot.slane %v635, 1
  %v644 = vrot.slane %v636, 1
  %v645 = vrot.slane %v637, 1
  %vm646 = vcmp.le.s32.totalorder %v412, 0
  %vm647 = vcmp.ge.s32.totalorder %v412, 2
  %v648 = vsel %vm647, %v638, 0.0
  %v649 = vsel %vm647, %v639, 0.0
  %v650 = vsel %vm647, %v640, 0.0
  %v651 = vsel %vm647, %v641, 0.0
  %v652 = vsel %vm647, %v642, 0.0
  %v653 = vsel %vm647, %v643, 0.0
  %v654 = vsel %vm647, %v644, 0.0
  %v655 = vsel %vm647, %v645, 0.0
  %v656 = vsel %vm646, %v630, %v648
  %v657 = vsel %vm646, %v631, %v649
  %v658 = vsel %vm646, %v632, %v650
  %v659 = vsel %vm646, %v633, %v651
  %v660 = vsel %vm646, %v634, %v652
  %v661 = vsel %vm646, %v635, %v653
  %v662 = vsel %vm646, %v636, %v654
  %v663 = vsel %vm646, %v637, %v655
  %665 = vrot.lane.b32.xlu0 %v159, 96
  %v666 = vpop.permute.xlu0 %665
  %v668 = vsel %vm208, %v131, 0
  %v671 = vsel %vm208, %v666, 0
  %673 = vmatprep.subr.bf16.mxu0 0
  %674 = vmatpush1.bf16.xpose.msra.mxu0 %v671
  %675 = vmatprep.subr.bf16.mxu0 0
  %676 = vmatpush1.bf16.xpose.msra.mxu0 0
  %677 = vmatprep.subr.bf16.mxu0 0
  %678 = vmatpush1.bf16.xpose.msra.mxu0 0
  %679 = vmatprep.subr.bf16.mxu0 0
  %680 = vmatpush1.bf16.xpose.msra.mxu0 0
  %681 = vmatprep.subr.bf16.mxu0 0
  %682 = vmatpush1.bf16.xpose.msra.mxu0 0
  %683 = vmatprep.subr.bf16.mxu0 0
  %684 = vmatpush1.bf16.xpose.msra.mxu0 0
  %685 = vmatprep.subr.bf16.mxu0 0
  %686 = vmatpush1.bf16.xpose.msra.mxu0 0
  %687 = vmatprep.subr.bf16.mxu0 0
  %688 = vmatpush1.bf16.xpose.msra.mxu0 0
  %689 = vmatprep.subr.bf16.mxu0 0
  %690 = vmatpush1.bf16.xpose.msra.mxu0 0
  %691 = vmatprep.subr.bf16.mxu0 0
  %692 = vmatpush1.bf16.xpose.msra.mxu0 0
  %693 = vmatprep.subr.bf16.mxu0 0
  %694 = vmatpush1.bf16.xpose.msra.mxu0 0
  %695 = vmatprep.subr.bf16.mxu0 0
  %696 = vmatpush1.bf16.xpose.msra.mxu0 0
  %697 = vmatprep.subr.bf16.mxu0 0
  %698 = vmatpush1.bf16.xpose.msra.mxu0 0
  %699 = vmatprep.subr.bf16.mxu0 0
  %700 = vmatpush1.bf16.xpose.msra.mxu0 0
  %701 = vmatprep.subr.bf16.mxu0 0
  %702 = vmatpush1.bf16.xpose.msra.mxu0 0
  %703 = vmatprep.subr.bf16.mxu0 0
  %704 = vmatpush1.bf16.xpose.msra.mxu0 0
  %705 = vmatprep.mubr.bf16.mxu0 0
  %706 = vmatmul.mubr.bf16.gmra.mrb[0].mxu0 %v668
  %v707 = vpop.f32.mrb[0].mxu0
  %v708 = vadd.f32 %v656, %v707
  %v709 = vpop.f32.mrb[0].mxu0
  %v710 = vpop.f32.mrb[0].mxu0
  %v711 = vpop.f32.mrb[0].mxu0
  %712 = vdwg.mxu0
  %714 = vrot.lane.b32.xlu0 %v160, 96
  %v715 = vpop.permute.xlu0 %714
  %v717 = vsel %vm208, %v132, 0
  %v720 = vsel %vm208, %v715, 0
  %722 = vmatprep.subr.bf16.mxu0 0
  %723 = vmatpush1.bf16.xpose.msra.mxu0 %v720
  %724 = vmatprep.subr.bf16.mxu0 0
  %725 = vmatpush1.bf16.xpose.msra.mxu0 0
  %726 = vmatprep.subr.bf16.mxu0 0
  %727 = vmatpush1.bf16.xpose.msra.mxu0 0
  %728 = vmatprep.subr.bf16.mxu0 0
  %729 = vmatpush1.bf16.xpose.msra.mxu0 0
  %730 = vmatprep.subr.bf16.mxu0 0
  %731 = vmatpush1.bf16.xpose.msra.mxu0 0
  %732 = vmatprep.subr.bf16.mxu0 0
  %733 = vmatpush1.bf16.xpose.msra.mxu0 0
  %734 = vmatprep.subr.bf16.mxu0 0
  %735 = vmatpush1.bf16.xpose.msra.mxu0 0
  %736 = vmatprep.subr.bf16.mxu0 0
  %737 = vmatpush1.bf16.xpose.msra.mxu0 0
  %738 = vmatprep.subr.bf16.mxu0 0
  %739 = vmatpush1.bf16.xpose.msra.mxu0 0
  %740 = vmatprep.subr.bf16.mxu0 0
  %741 = vmatpush1.bf16.xpose.msra.mxu0 0
  %742 = vmatprep.subr.bf16.mxu0 0
  %743 = vmatpush1.bf16.xpose.msra.mxu0 0
  %744 = vmatprep.subr.bf16.mxu0 0
  %745 = vmatpush1.bf16.xpose.msra.mxu0 0
  %746 = vmatprep.subr.bf16.mxu0 0
  %747 = vmatpush1.bf16.xpose.msra.mxu0 0
  %748 = vmatprep.subr.bf16.mxu0 0
  %749 = vmatpush1.bf16.xpose.msra.mxu0 0
  %750 = vmatprep.subr.bf16.mxu0 0
  %751 = vmatpush1.bf16.xpose.msra.mxu0 0
  %752 = vmatprep.subr.bf16.mxu0 0
  %753 = vmatpush1.bf16.xpose.msra.mxu0 0
  %754 = vmatprep.mubr.bf16.mxu0 0
  %755 = vmatmul.mubr.bf16.gmra.mrb[0].mxu0 %v717
  %v756 = vpop.f32.mrb[0].mxu0
  %v757 = vadd.f32 %v657, %v756
  %v758 = vpop.f32.mrb[0].mxu0
  %v759 = vpop.f32.mrb[0].mxu0
  %v760 = vpop.f32.mrb[0].mxu0
  %761 = vdwg.mxu0
  %763 = vrot.lane.b32.xlu0 %v161, 96
  %v764 = vpop.permute.xlu0 %763
  %v766 = vsel %vm208, %v133, 0
  %v769 = vsel %vm208, %v764, 0
  %771 = vmatprep.subr.bf16.mxu0 0
  %772 = vmatpush1.bf16.xpose.msra.mxu0 %v769
  %773 = vmatprep.subr.bf16.mxu0 0
  %774 = vmatpush1.bf16.xpose.msra.mxu0 0
  %775 = vmatprep.subr.bf16.mxu0 0
  %776 = vmatpush1.bf16.xpose.msra.mxu0 0
  %777 = vmatprep.subr.bf16.mxu0 0
  %778 = vmatpush1.bf16.xpose.msra.mxu0 0
  %779 = vmatprep.subr.bf16.mxu0 0
  %780 = vmatpush1.bf16.xpose.msra.mxu0 0
  %781 = vmatprep.subr.bf16.mxu0 0
  %782 = vmatpush1.bf16.xpose.msra.mxu0 0
  %783 = vmatprep.subr.bf16.mxu0 0
  %784 = vmatpush1.bf16.xpose.msra.mxu0 0
  %785 = vmatprep.subr.bf16.mxu0 0
  %786 = vmatpush1.bf16.xpose.msra.mxu0 0
  %787 = vmatprep.subr.bf16.mxu0 0
  %788 = vmatpush1.bf16.xpose.msra.mxu0 0
  %789 = vmatprep.subr.bf16.mxu0 0
  %790 = vmatpush1.bf16.xpose.msra.mxu0 0
  %791 = vmatprep.subr.bf16.mxu0 0
  %792 = vmatpush1.bf16.xpose.msra.mxu0 0
  %793 = vmatprep.subr.bf16.mxu0 0
  %794 = vmatpush1.bf16.xpose.msra.mxu0 0
  %795 = vmatprep.subr.bf16.mxu0 0
  %796 = vmatpush1.bf16.xpose.msra.mxu0 0
  %797 = vmatprep.subr.bf16.mxu0 0
  %798 = vmatpush1.bf16.xpose.msra.mxu0 0
  %799 = vmatprep.subr.bf16.mxu0 0
  %800 = vmatpush1.bf16.xpose.msra.mxu0 0
  %801 = vmatprep.subr.bf16.mxu0 0
  %802 = vmatpush1.bf16.xpose.msra.mxu0 0
  %803 = vmatprep.mubr.bf16.mxu0 0
  %804 = vmatmul.mubr.bf16.gmra.mrb[0].mxu0 %v766
  %v805 = vpop.f32.mrb[0].mxu0
  %v806 = vadd.f32 %v658, %v805
  %v807 = vpop.f32.mrb[0].mxu0
  %v808 = vpop.f32.mrb[0].mxu0
  %v809 = vpop.f32.mrb[0].mxu0
  %810 = vdwg.mxu0
  %812 = vrot.lane.b32.xlu0 %v162, 96
  %v813 = vpop.permute.xlu0 %812
  %v815 = vsel %vm208, %v134, 0
  %v818 = vsel %vm208, %v813, 0
  %820 = vmatprep.subr.bf16.mxu0 0
  %821 = vmatpush1.bf16.xpose.msra.mxu0 %v818
  %822 = vmatprep.subr.bf16.mxu0 0
  %823 = vmatpush1.bf16.xpose.msra.mxu0 0
  %824 = vmatprep.subr.bf16.mxu0 0
  %825 = vmatpush1.bf16.xpose.msra.mxu0 0
  %826 = vmatprep.subr.bf16.mxu0 0
  %827 = vmatpush1.bf16.xpose.msra.mxu0 0
  %828 = vmatprep.subr.bf16.mxu0 0
  %829 = vmatpush1.bf16.xpose.msra.mxu0 0
  %830 = vmatprep.subr.bf16.mxu0 0
  %831 = vmatpush1.bf16.xpose.msra.mxu0 0
  %832 = vmatprep.subr.bf16.mxu0 0
  %833 = vmatpush1.bf16.xpose.msra.mxu0 0
  %834 = vmatprep.subr.bf16.mxu0 0
  %835 = vmatpush1.bf16.xpose.msra.mxu0 0
  %836 = vmatprep.subr.bf16.mxu0 0
  %837 = vmatpush1.bf16.xpose.msra.mxu0 0
  %838 = vmatprep.subr.bf16.mxu0 0
  %839 = vmatpush1.bf16.xpose.msra.mxu0 0
  %840 = vmatprep.subr.bf16.mxu0 0
  %841 = vmatpush1.bf16.xpose.msra.mxu0 0
  %842 = vmatprep.subr.bf16.mxu0 0
  %843 = vmatpush1.bf16.xpose.msra.mxu0 0
  %844 = vmatprep.subr.bf16.mxu0 0
  %845 = vmatpush1.bf16.xpose.msra.mxu0 0
  %846 = vmatprep.subr.bf16.mxu0 0
  %847 = vmatpush1.bf16.xpose.msra.mxu0 0
  %848 = vmatprep.subr.bf16.mxu0 0
  %849 = vmatpush1.bf16.xpose.msra.mxu0 0
  %850 = vmatprep.subr.bf16.mxu0 0
  %851 = vmatpush1.bf16.xpose.msra.mxu0 0
  %852 = vmatprep.mubr.bf16.mxu0 0
  %853 = vmatmul.mubr.bf16.gmra.mrb[0].mxu0 %v815
  %v854 = vpop.f32.mrb[0].mxu0
  %v855 = vadd.f32 %v659, %v854
  %v856 = vpop.f32.mrb[0].mxu0
  %v857 = vpop.f32.mrb[0].mxu0
  %v858 = vpop.f32.mrb[0].mxu0
  %859 = vdwg.mxu0
  %861 = vrot.lane.b32.xlu0 %v163, 96
  %v862 = vpop.permute.xlu0 %861
  %v864 = vsel %vm208, %v135, 0
  %v867 = vsel %vm208, %v862, 0
  %869 = vmatprep.subr.bf16.mxu0 0
  %870 = vmatpush1.bf16.xpose.msra.mxu0 %v867
  %871 = vmatprep.subr.bf16.mxu0 0
  %872 = vmatpush1.bf16.xpose.msra.mxu0 0
  %873 = vmatprep.subr.bf16.mxu0 0
  %874 = vmatpush1.bf16.xpose.msra.mxu0 0
  %875 = vmatprep.subr.bf16.mxu0 0
  %876 = vmatpush1.bf16.xpose.msra.mxu0 0
  %877 = vmatprep.subr.bf16.mxu0 0
  %878 = vmatpush1.bf16.xpose.msra.mxu0 0
  %879 = vmatprep.subr.bf16.mxu0 0
  %880 = vmatpush1.bf16.xpose.msra.mxu0 0
  %881 = vmatprep.subr.bf16.mxu0 0
  %882 = vmatpush1.bf16.xpose.msra.mxu0 0
  %883 = vmatprep.subr.bf16.mxu0 0
  %884 = vmatpush1.bf16.xpose.msra.mxu0 0
  %885 = vmatprep.subr.bf16.mxu0 0
  %886 = vmatpush1.bf16.xpose.msra.mxu0 0
  %887 = vmatprep.subr.bf16.mxu0 0
  %888 = vmatpush1.bf16.xpose.msra.mxu0 0
  %889 = vmatprep.subr.bf16.mxu0 0
  %890 = vmatpush1.bf16.xpose.msra.mxu0 0
  %891 = vmatprep.subr.bf16.mxu0 0
  %892 = vmatpush1.bf16.xpose.msra.mxu0 0
  %893 = vmatprep.subr.bf16.mxu0 0
  %894 = vmatpush1.bf16.xpose.msra.mxu0 0
  %895 = vmatprep.subr.bf16.mxu0 0
  %896 = vmatpush1.bf16.xpose.msra.mxu0 0
  %897 = vmatprep.subr.bf16.mxu0 0
  %898 = vmatpush1.bf16.xpose.msra.mxu0 0
  %899 = vmatprep.subr.bf16.mxu0 0
  %900 = vmatpush1.bf16.xpose.msra.mxu0 0
  %901 = vmatprep.mubr.bf16.mxu0 0
  %902 = vmatmul.mubr.bf16.gmra.mrb[0].mxu0 %v864
  %v903 = vpop.f32.mrb[0].mxu0
  %v904 = vadd.f32 %v660, %v903
  %v905 = vpop.f32.mrb[0].mxu0
  %v906 = vpop.f32.mrb[0].mxu0
  %v907 = vpop.f32.mrb[0].mxu0
  %908 = vdwg.mxu0
  %910 = vrot.lane.b32.xlu0 %v164, 96
  %v911 = vpop.permute.xlu0 %910
  %v913 = vsel %vm208, %v136, 0
  %v916 = vsel %vm208, %v911, 0
  %918 = vmatprep.subr.bf16.mxu0 0
  %919 = vmatpush1.bf16.xpose.msra.mxu0 %v916
  %920 = vmatprep.subr.bf16.mxu0 0
  %921 = vmatpush1.bf16.xpose.msra.mxu0 0
  %922 = vmatprep.subr.bf16.mxu0 0
  %923 = vmatpush1.bf16.xpose.msra.mxu0 0
  %924 = vmatprep.subr.bf16.mxu0 0
  %925 = vmatpush1.bf16.xpose.msra.mxu0 0
  %926 = vmatprep.subr.bf16.mxu0 0
  %927 = vmatpush1.bf16.xpose.msra.mxu0 0
  %928 = vmatprep.subr.bf16.mxu0 0
  %929 = vmatpush1.bf16.xpose.msra.mxu0 0
  %930 = vmatprep.subr.bf16.mxu0 0
  %931 = vmatpush1.bf16.xpose.msra.mxu0 0
  %932 = vmatprep.subr.bf16.mxu0 0
  %933 = vmatpush1.bf16.xpose.msra.mxu0 0
  %934 = vmatprep.subr.bf16.mxu0 0
  %935 = vmatpush1.bf16.xpose.msra.mxu0 0
  %936 = vmatprep.subr.bf16.mxu0 0
  %937 = vmatpush1.bf16.xpose.msra.mxu0 0
  %938 = vmatprep.subr.bf16.mxu0 0
  %939 = vmatpush1.bf16.xpose.msra.mxu0 0
  %940 = vmatprep.subr.bf16.mxu0 0
  %941 = vmatpush1.bf16.xpose.msra.mxu0 0
  %942 = vmatprep.subr.bf16.mxu0 0
  %943 = vmatpush1.bf16.xpose.msra.mxu0 0
  %944 = vmatprep.subr.bf16.mxu0 0
  %945 = vmatpush1.bf16.xpose.msra.mxu0 0
  %946 = vmatprep.subr.bf16.mxu0 0
  %947 = vmatpush1.bf16.xpose.msra.mxu0 0
  %948 = vmatprep.subr.bf16.mxu0 0
  %949 = vmatpush1.bf16.xpose.msra.mxu0 0
  %950 = vmatprep.mubr.bf16.mxu0 0
  %951 = vmatmul.mubr.bf16.gmra.mrb[0].mxu0 %v913
  %v952 = vpop.f32.mrb[0].mxu0
  %v953 = vadd.f32 %v661, %v952
  %v954 = vpop.f32.mrb[0].mxu0
  %v955 = vpop.f32.mrb[0].mxu0
  %v956 = vpop.f32.mrb[0].mxu0
  %957 = vdwg.mxu0
  %959 = vrot.lane.b32.xlu0 %v165, 96
  %v960 = vpop.permute.xlu0 %959
  %v962 = vsel %vm208, %v137, 0
  %v965 = vsel %vm208, %v960, 0
  %967 = vmatprep.subr.bf16.mxu0 0
  %968 = vmatpush1.bf16.xpose.msra.mxu0 %v965
  %969 = vmatprep.subr.bf16.mxu0 0
  %970 = vmatpush1.bf16.xpose.msra.mxu0 0
  %971 = vmatprep.subr.bf16.mxu0 0
  %972 = vmatpush1.bf16.xpose.msra.mxu0 0
  %973 = vmatprep.subr.bf16.mxu0 0
  %974 = vmatpush1.bf16.xpose.msra.mxu0 0
  %975 = vmatprep.subr.bf16.mxu0 0
  %976 = vmatpush1.bf16.xpose.msra.mxu0 0
  %977 = vmatprep.subr.bf16.mxu0 0
  %978 = vmatpush1.bf16.xpose.msra.mxu0 0
  %979 = vmatprep.subr.bf16.mxu0 0
  %980 = vmatpush1.bf16.xpose.msra.mxu0 0
  %981 = vmatprep.subr.bf16.mxu0 0
  %982 = vmatpush1.bf16.xpose.msra.mxu0 0
  %983 = vmatprep.subr.bf16.mxu0 0
  %984 = vmatpush1.bf16.xpose.msra.mxu0 0
  %985 = vmatprep.subr.bf16.mxu0 0
  %986 = vmatpush1.bf16.xpose.msra.mxu0 0
  %987 = vmatprep.subr.bf16.mxu0 0
  %988 = vmatpush1.bf16.xpose.msra.mxu0 0
  %989 = vmatprep.subr.bf16.mxu0 0
  %990 = vmatpush1.bf16.xpose.msra.mxu0 0
  %991 = vmatprep.subr.bf16.mxu0 0
  %992 = vmatpush1.bf16.xpose.msra.mxu0 0
  %993 = vmatprep.subr.bf16.mxu0 0
  %994 = vmatpush1.bf16.xpose.msra.mxu0 0
  %995 = vmatprep.subr.bf16.mxu0 0
  %996 = vmatpush1.bf16.xpose.msra.mxu0 0
  %997 = vmatprep.subr.bf16.mxu0 0
  %998 = vmatpush1.bf16.xpose.msra.mxu0 0
  %999 = vmatprep.mubr.bf16.mxu0 0
  %1000 = vmatmul.mubr.bf16.gmra.mrb[0].mxu0 %v962
  %v1001 = vpop.f32.mrb[0].mxu0
  %v1002 = vadd.f32 %v662, %v1001
  %v1003 = vpop.f32.mrb[0].mxu0
  %v1004 = vpop.f32.mrb[0].mxu0
  %v1005 = vpop.f32.mrb[0].mxu0
  %1006 = vdwg.mxu0
  %1008 = vrot.lane.b32.xlu0 %v166, 96
  %v1009 = vpop.permute.xlu0 %1008
  %v1011 = vsel %vm208, %v138, 0
  %v1014 = vsel %vm208, %v1009, 0
  %1016 = vmatprep.subr.bf16.mxu0 0
  %1017 = vmatpush1.bf16.xpose.msra.mxu0 %v1014
  %1018 = vmatprep.subr.bf16.mxu0 0
  %1019 = vmatpush1.bf16.xpose.msra.mxu0 0
  %1020 = vmatprep.subr.bf16.mxu0 0
  %1021 = vmatpush1.bf16.xpose.msra.mxu0 0
  %1022 = vmatprep.subr.bf16.mxu0 0
  %1023 = vmatpush1.bf16.xpose.msra.mxu0 0
  %1024 = vmatprep.subr.bf16.mxu0 0
  %1025 = vmatpush1.bf16.xpose.msra.mxu0 0
  %1026 = vmatprep.subr.bf16.mxu0 0
  %1027 = vmatpush1.bf16.xpose.msra.mxu0 0
  %1028 = vmatprep.subr.bf16.mxu0 0
  %1029 = vmatpush1.bf16.xpose.msra.mxu0 0
  %1030 = vmatprep.subr.bf16.mxu0 0
  %1031 = vmatpush1.bf16.xpose.msra.mxu0 0
  %1032 = vmatprep.subr.bf16.mxu0 0
  %1033 = vmatpush1.bf16.xpose.msra.mxu0 0
  %1034 = vmatprep.subr.bf16.mxu0 0
  %1035 = vmatpush1.bf16.xpose.msra.mxu0 0
  %1036 = vmatprep.subr.bf16.mxu0 0
  %1037 = vmatpush1.bf16.xpose.msra.mxu0 0
  %1038 = vmatprep.subr.bf16.mxu0 0
  %1039 = vmatpush1.bf16.xpose.msra.mxu0 0
  %1040 = vmatprep.subr.bf16.mxu0 0
  %1041 = vmatpush1.bf16.xpose.msra.mxu0 0
  %1042 = vmatprep.subr.bf16.mxu0 0
  %1043 = vmatpush1.bf16.xpose.msra.mxu0 0
  %1044 = vmatprep.subr.bf16.mxu0 0
  %1045 = vmatpush1.bf16.xpose.msra.mxu0 0
  %1046 = vmatprep.subr.bf16.mxu0 0
  %1047 = vmatpush1.bf16.xpose.msra.mxu0 0
  %1048 = vmatprep.mubr.bf16.mxu0 0
  %1049 = vmatmul.mubr.bf16.gmra.mrb[0].mxu0 %v1011
  %v1050 = vpop.f32.mrb[0].mxu0
  %v1051 = vadd.f32 %v663, %v1050
  %v1052 = vpop.f32.mrb[0].mxu0
  %v1053 = vpop.f32.mrb[0].mxu0
  %v1054 = vpop.f32.mrb[0].mxu0
  %1055 = vdwg.mxu0
  %v1056 = vmul.f32 %v708, 0.35355338
  %v1057 = vmul.f32 %v757, 0.35355338
  %v1058 = vmul.f32 %v806, 0.35355338
  %v1059 = vmul.f32 %v855, 0.35355338
  %v1060 = vmul.f32 %v904, 0.35355338
  %v1061 = vmul.f32 %v953, 0.35355338
  %v1062 = vmul.f32 %v1002, 0.35355338
  %v1063 = vmul.f32 %v1051, 0.35355338
  %v1064 = vsel %vm208, %v1056, -inf
  %1065 = vmax.xlane.f32.xlu0 %v1064
  %v1066 = vpop.xlane.xlu0 %1065
  %v1067 = vsel %vm208, %v1057, -inf
  %1068 = vmax.xlane.f32.xlu0 %v1067
  %v1069 = vpop.xlane.xlu0 %1068
  %v1070 = vsel %vm208, %v1058, -inf
  %1071 = vmax.xlane.f32.xlu0 %v1070
  %v1072 = vpop.xlane.xlu0 %1071
  %v1073 = vsel %vm208, %v1059, -inf
  %1074 = vmax.xlane.f32.xlu0 %v1073
  %v1075 = vpop.xlane.xlu0 %1074
  %v1076 = vsel %vm208, %v1060, -inf
  %1077 = vmax.xlane.f32.xlu0 %v1076
  %v1078 = vpop.xlane.xlu0 %1077
  %v1079 = vsel %vm208, %v1061, -inf
  %1080 = vmax.xlane.f32.xlu0 %v1079
  %v1081 = vpop.xlane.xlu0 %1080
  %v1082 = vsel %vm208, %v1062, -inf
  %1083 = vmax.xlane.f32.xlu0 %v1082
  %v1084 = vpop.xlane.xlu0 %1083
  %v1085 = vsel %vm208, %v1063, -inf
  %1086 = vmax.xlane.f32.xlu0 %v1085
  %v1087 = vpop.xlane.xlu0 %1086
  %v1088 = vsub.f32 %v1056, %v1066
  %v1089 = vsub.f32 %v1057, %v1069
  %v1090 = vsub.f32 %v1058, %v1072
  %v1091 = vsub.f32 %v1059, %v1075
  %v1092 = vsub.f32 %v1060, %v1078
  %v1093 = vsub.f32 %v1061, %v1081
  %v1094 = vsub.f32 %v1062, %v1084
  %v1095 = vsub.f32 %v1063, %v1087
  %v1096 = vmul.f32 %v1088, 1.442695
  %v1097 = vpow.pop %v1096
  %v1098 = vmul.f32 %v1089, 1.442695
  %v1099 = vpow.pop %v1098
  %v1100 = vmul.f32 %v1090, 1.442695
  %v1101 = vpow.pop %v1100
  %v1102 = vmul.f32 %v1091, 1.442695
  %v1103 = vpow.pop %v1102
  %v1104 = vmul.f32 %v1092, 1.442695
  %v1105 = vpow.pop %v1104
  %v1106 = vmul.f32 %v1093, 1.442695
  %v1107 = vpow.pop %v1106
  %v1108 = vmul.f32 %v1094, 1.442695
  %v1109 = vpow.pop %v1108
  %v1110 = vmul.f32 %v1095, 1.442695
  %v1111 = vpow.pop %v1110
  %v1112 = vsel %vm208, %v1097, 0.0
  %1113 = vadd.xlane.f32.xlu0 %v1112
  %v1114 = vpop.xlane.xlu0 %1113
  %v1115 = vsel %vm208, %v1099, 0.0
  %1116 = vadd.xlane.f32.xlu0 %v1115
  %v1117 = vpop.xlane.xlu0 %1116
  %v1118 = vsel %vm208, %v1101, 0.0
  %1119 = vadd.xlane.f32.xlu0 %v1118
  %v1120 = vpop.xlane.xlu0 %1119
  %v1121 = vsel %vm208, %v1103, 0.0
  %1122 = vadd.xlane.f32.xlu0 %v1121
  %v1123 = vpop.xlane.xlu0 %1122
  %v1124 = vsel %vm208, %v1105, 0.0
  %1125 = vadd.xlane.f32.xlu0 %v1124
  %v1126 = vpop.xlane.xlu0 %1125
  %v1127 = vsel %vm208, %v1107, 0.0
  %1128 = vadd.xlane.f32.xlu0 %v1127
  %v1129 = vpop.xlane.xlu0 %1128
  %v1130 = vsel %vm208, %v1109, 0.0
  %1131 = vadd.xlane.f32.xlu0 %v1130
  %v1132 = vpop.xlane.xlu0 %1131
  %v1133 = vsel %vm208, %v1111, 0.0
  %1134 = vadd.xlane.f32.xlu0 %v1133
  %v1135 = vpop.xlane.xlu0 %1134
  %v1136 = vrcp.pop %v1114
  %v1137 = vrcp.pop %v1117
  %v1138 = vrcp.pop %v1120
  %v1139 = vrcp.pop %v1123
  %v1140 = vrcp.pop %v1126
  %v1141 = vrcp.pop %v1129
  %v1142 = vrcp.pop %v1132
  %v1143 = vrcp.pop %v1135
  %v1144 = vmul.f32 %v1097, %v1136
  %v1145 = vmul.f32 %v1099, %v1137
  %v1146 = vmul.f32 %v1101, %v1138
  %v1147 = vmul.f32 %v1103, %v1139
  %v1148 = vmul.f32 %v1105, %v1140
  %v1149 = vmul.f32 %v1107, %v1141
  %v1150 = vmul.f32 %v1109, %v1142
  %v1151 = vmul.f32 %v1111, %v1143
  %v1152 = vpack.c.bf16 %v1144, %v1144
  %v1153 = vpack.c.bf16 %v1145, %v1145
  %v1154 = vpack.c.bf16 %v1146, %v1146
  %v1155 = vpack.c.bf16 %v1147, %v1147
  %v1156 = vpack.c.bf16 %v1148, %v1148
  %v1157 = vpack.c.bf16 %v1149, %v1149
  %v1158 = vpack.c.bf16 %v1150, %v1150
  %v1159 = vpack.c.bf16 %v1151, %v1151
  %1160 = vrot.lane.b32.xlu0 %v159, 64
  %v1161 = vpop.permute.xlu0 %1160
  %v1163 = vsel %vm208, %v1152, 0
  %vm1165 = vcmask 1043456
  %v1167 = vsel %vm1165, %v1161, 0
  %1169 = vmatprep.subr.bf16.mxu0 0
  %1170 = vmatpush1.bf16.msra.mxu0 %v1167
  %1171 = vmatprep.subr.bf16.mxu0 0
  %1172 = vmatpush1.bf16.msra.mxu0 0
  %1173 = vmatprep.subr.bf16.mxu0 0
  %1174 = vmatpush1.bf16.msra.mxu0 0
  %1175 = vmatprep.subr.bf16.mxu0 0
  %1176 = vmatpush1.bf16.msra.mxu0 0
  %1177 = vmatprep.subr.bf16.mxu0 0
  %1178 = vmatpush1.bf16.msra.mxu0 0
  %1179 = vmatprep.subr.bf16.mxu0 0
  %1180 = vmatpush1.bf16.msra.mxu0 0
  %1181 = vmatprep.subr.bf16.mxu0 0
  %1182 = vmatpush1.bf16.msra.mxu0 0
  %1183 = vmatprep.subr.bf16.mxu0 0
  %1184 = vmatpush1.bf16.msra.mxu0 0
  %1185 = vmatprep.subr.bf16.mxu0 0
  %1186 = vmatpush1.bf16.msra.mxu0 0
  %1187 = vmatprep.subr.bf16.mxu0 0
  %1188 = vmatpush1.bf16.msra.mxu0 0
  %1189 = vmatprep.subr.bf16.mxu0 0
  %1190 = vmatpush1.bf16.msra.mxu0 0
  %1191 = vmatprep.subr.bf16.mxu0 0
  %1192 = vmatpush1.bf16.msra.mxu0 0
  %1193 = vmatprep.subr.bf16.mxu0 0
  %1194 = vmatpush1.bf16.msra.mxu0 0
  %1195 = vmatprep.subr.bf16.mxu0 0
  %1196 = vmatpush1.bf16.msra.mxu0 0
  %1197 = vmatprep.subr.bf16.mxu0 0
  %1198 = vmatpush1.bf16.msra.mxu0 0
  %1199 = vmatprep.subr.bf16.mxu0 0
  %1200 = vmatpush1.bf16.msra.mxu0 0
  %1201 = vmatprep.mubr.bf16.mxu0 0
  %1202 = vmatmul.mubr.bf16.gmra.mrb[0].mxu0 %v1163
  %v1203 = vpop.f32.mrb[0].mxu0
  %v1204 = vadd.f32 0.0, %v1203
  %v1205 = vpop.f32.mrb[0].mxu0
  %v1206 = vpop.f32.mrb[0].mxu0
  %v1207 = vpop.f32.mrb[0].mxu0
  %1208 = vdwg.mxu0
  %1209 = vrot.lane.b32.xlu0 %v160, 64
  %v1210 = vpop.permute.xlu0 %1209
  %v1212 = vsel %vm208, %v1153, 0
  %v1215 = vsel %vm1165, %v1210, 0
  %1217 = vmatprep.subr.bf16.mxu0 0
  %1218 = vmatpush1.bf16.msra.mxu0 %v1215
  %1219 = vmatprep.subr.bf16.mxu0 0
  %1220 = vmatpush1.bf16.msra.mxu0 0
  %1221 = vmatprep.subr.bf16.mxu0 0
  %1222 = vmatpush1.bf16.msra.mxu0 0
  %1223 = vmatprep.subr.bf16.mxu0 0
  %1224 = vmatpush1.bf16.msra.mxu0 0
  %1225 = vmatprep.subr.bf16.mxu0 0
  %1226 = vmatpush1.bf16.msra.mxu0 0
  %1227 = vmatprep.subr.bf16.mxu0 0
  %1228 = vmatpush1.bf16.msra.mxu0 0
  %1229 = vmatprep.subr.bf16.mxu0 0
  %1230 = vmatpush1.bf16.msra.mxu0 0
  %1231 = vmatprep.subr.bf16.mxu0 0
  %1232 = vmatpush1.bf16.msra.mxu0 0
  %1233 = vmatprep.subr.bf16.mxu0 0
  %1234 = vmatpush1.bf16.msra.mxu0 0
  %1235 = vmatprep.subr.bf16.mxu0 0
  %1236 = vmatpush1.bf16.msra.mxu0 0
  %1237 = vmatprep.subr.bf16.mxu0 0
  %1238 = vmatpush1.bf16.msra.mxu0 0
  %1239 = vmatprep.subr.bf16.mxu0 0
  %1240 = vmatpush1.bf16.msra.mxu0 0
  %1241 = vmatprep.subr.bf16.mxu0 0
  %1242 = vmatpush1.bf16.msra.mxu0 0
  %1243 = vmatprep.subr.bf16.mxu0 0
  %1244 = vmatpush1.bf16.msra.mxu0 0
  %1245 = vmatprep.subr.bf16.mxu0 0
  %1246 = vmatpush1.bf16.msra.mxu0 0
  %1247 = vmatprep.subr.bf16.mxu0 0
  %1248 = vmatpush1.bf16.msra.mxu0 0
  %1249 = vmatprep.mubr.bf16.mxu0 0
  %1250 = vmatmul.mubr.bf16.gmra.mrb[0].mxu0 %v1212
  %v1251 = vpop.f32.mrb[0].mxu0
  %v1252 = vadd.f32 0.0, %v1251
  %v1253 = vpop.f32.mrb[0].mxu0
  %v1254 = vpop.f32.mrb[0].mxu0
  %v1255 = vpop.f32.mrb[0].mxu0
  %1256 = vdwg.mxu0
  %1257 = vrot.lane.b32.xlu0 %v161, 64
  %v1258 = vpop.permute.xlu0 %1257
  %v1260 = vsel %vm208, %v1154, 0
  %v1263 = vsel %vm1165, %v1258, 0
  %1265 = vmatprep.subr.bf16.mxu0 0
  %1266 = vmatpush1.bf16.msra.mxu0 %v1263
  %1267 = vmatprep.subr.bf16.mxu0 0
  %1268 = vmatpush1.bf16.msra.mxu0 0
  %1269 = vmatprep.subr.bf16.mxu0 0
  %1270 = vmatpush1.bf16.msra.mxu0 0
  %1271 = vmatprep.subr.bf16.mxu0 0
  %1272 = vmatpush1.bf16.msra.mxu0 0
  %1273 = vmatprep.subr.bf16.mxu0 0
  %1274 = vmatpush1.bf16.msra.mxu0 0
  %1275 = vmatprep.subr.bf16.mxu0 0
  %1276 = vmatpush1.bf16.msra.mxu0 0
  %1277 = vmatprep.subr.bf16.mxu0 0
  %1278 = vmatpush1.bf16.msra.mxu0 0
  %1279 = vmatprep.subr.bf16.mxu0 0
  %1280 = vmatpush1.bf16.msra.mxu0 0
  %1281 = vmatprep.subr.bf16.mxu0 0
  %1282 = vmatpush1.bf16.msra.mxu0 0
  %1283 = vmatprep.subr.bf16.mxu0 0
  %1284 = vmatpush1.bf16.msra.mxu0 0
  %1285 = vmatprep.subr.bf16.mxu0 0
  %1286 = vmatpush1.bf16.msra.mxu0 0
  %1287 = vmatprep.subr.bf16.mxu0 0
  %1288 = vmatpush1.bf16.msra.mxu0 0
  %1289 = vmatprep.subr.bf16.mxu0 0
  %1290 = vmatpush1.bf16.msra.mxu0 0
  %1291 = vmatprep.subr.bf16.mxu0 0
  %1292 = vmatpush1.bf16.msra.mxu0 0
  %1293 = vmatprep.subr.bf16.mxu0 0
  %1294 = vmatpush1.bf16.msra.mxu0 0
  %1295 = vmatprep.subr.bf16.mxu0 0
  %1296 = vmatpush1.bf16.msra.mxu0 0
  %1297 = vmatprep.mubr.bf16.mxu0 0
  %1298 = vmatmul.mubr.bf16.gmra.mrb[0].mxu0 %v1260
  %v1299 = vpop.f32.mrb[0].mxu0
  %v1300 = vadd.f32 0.0, %v1299
  %v1301 = vpop.f32.mrb[0].mxu0
  %v1302 = vpop.f32.mrb[0].mxu0
  %v1303 = vpop.f32.mrb[0].mxu0
  %1304 = vdwg.mxu0
  %1305 = vrot.lane.b32.xlu0 %v162, 64
  %v1306 = vpop.permute.xlu0 %1305
  %v1308 = vsel %vm208, %v1155, 0
  %v1311 = vsel %vm1165, %v1306, 0
  %1313 = vmatprep.subr.bf16.mxu0 0
  %1314 = vmatpush1.bf16.msra.mxu0 %v1311
  %1315 = vmatprep.subr.bf16.mxu0 0
  %1316 = vmatpush1.bf16.msra.mxu0 0
  %1317 = vmatprep.subr.bf16.mxu0 0
  %1318 = vmatpush1.bf16.msra.mxu0 0
  %1319 = vmatprep.subr.bf16.mxu0 0
  %1320 = vmatpush1.bf16.msra.mxu0 0
  %1321 = vmatprep.subr.bf16.mxu0 0
  %1322 = vmatpush1.bf16.msra.mxu0 0
  %1323 = vmatprep.subr.bf16.mxu0 0
  %1324 = vmatpush1.bf16.msra.mxu0 0
  %1325 = vmatprep.subr.bf16.mxu0 0
  %1326 = vmatpush1.bf16.msra.mxu0 0
  %1327 = vmatprep.subr.bf16.mxu0 0
  %1328 = vmatpush1.bf16.msra.mxu0 0
  %1329 = vmatprep.subr.bf16.mxu0 0
  %1330 = vmatpush1.bf16.msra.mxu0 0
  %1331 = vmatprep.subr.bf16.mxu0 0
  %1332 = vmatpush1.bf16.msra.mxu0 0
  %1333 = vmatprep.subr.bf16.mxu0 0
  %1334 = vmatpush1.bf16.msra.mxu0 0
  %1335 = vmatprep.subr.bf16.mxu0 0
  %1336 = vmatpush1.bf16.msra.mxu0 0
  %1337 = vmatprep.subr.bf16.mxu0 0
  %1338 = vmatpush1.bf16.msra.mxu0 0
  %1339 = vmatprep.subr.bf16.mxu0 0
  %1340 = vmatpush1.bf16.msra.mxu0 0
  %1341 = vmatprep.subr.bf16.mxu0 0
  %1342 = vmatpush1.bf16.msra.mxu0 0
  %1343 = vmatprep.subr.bf16.mxu0 0
  %1344 = vmatpush1.bf16.msra.mxu0 0
  %1345 = vmatprep.mubr.bf16.mxu0 0
  %1346 = vmatmul.mubr.bf16.gmra.mrb[0].mxu0 %v1308
  %v1347 = vpop.f32.mrb[0].mxu0
  %v1348 = vadd.f32 0.0, %v1347
  %v1349 = vpop.f32.mrb[0].mxu0
  %v1350 = vpop.f32.mrb[0].mxu0
  %v1351 = vpop.f32.mrb[0].mxu0
  %1352 = vdwg.mxu0
  %1353 = vrot.lane.b32.xlu0 %v163, 64
  %v1354 = vpop.permute.xlu0 %1353
  %v1356 = vsel %vm208, %v1156, 0
  %v1359 = vsel %vm1165, %v1354, 0
  %1361 = vmatprep.subr.bf16.mxu0 0
  %1362 = vmatpush1.bf16.msra.mxu0 %v1359
  %1363 = vmatprep.subr.bf16.mxu0 0
  %1364 = vmatpush1.bf16.msra.mxu0 0
  %1365 = vmatprep.subr.bf16.mxu0 0
  %1366 = vmatpush1.bf16.msra.mxu0 0
  %1367 = vmatprep.subr.bf16.mxu0 0
  %1368 = vmatpush1.bf16.msra.mxu0 0
  %1369 = vmatprep.subr.bf16.mxu0 0
  %1370 = vmatpush1.bf16.msra.mxu0 0
  %1371 = vmatprep.subr.bf16.mxu0 0
  %1372 = vmatpush1.bf16.msra.mxu0 0
  %1373 = vmatprep.subr.bf16.mxu0 0
  %1374 = vmatpush1.bf16.msra.mxu0 0
  %1375 = vmatprep.subr.bf16.mxu0 0
  %1376 = vmatpush1.bf16.msra.mxu0 0
  %1377 = vmatprep.subr.bf16.mxu0 0
  %1378 = vmatpush1.bf16.msra.mxu0 0
  %1379 = vmatprep.subr.bf16.mxu0 0
  %1380 = vmatpush1.bf16.msra.mxu0 0
  %1381 = vmatprep.subr.bf16.mxu0 0
  %1382 = vmatpush1.bf16.msra.mxu0 0
  %1383 = vmatprep.subr.bf16.mxu0 0
  %1384 = vmatpush1.bf16.msra.mxu0 0
  %1385 = vmatprep.subr.bf16.mxu0 0
  %1386 = vmatpush1.bf16.msra.mxu0 0
  %1387 = vmatprep.subr.bf16.mxu0 0
  %1388 = vmatpush1.bf16.msra.mxu0 0
  %1389 = vmatprep.subr.bf16.mxu0 0
  %1390 = vmatpush1.bf16.msra.mxu0 0
  %1391 = vmatprep.subr.bf16.mxu0 0
  %1392 = vmatpush1.bf16.msra.mxu0 0
  %1393 = vmatprep.mubr.bf16.mxu0 0
  %1394 = vmatmul.mubr.bf16.gmra.mrb[0].mxu0 %v1356
  %v1395 = vpop.f32.mrb[0].mxu0
  %v1396 = vadd.f32 0.0, %v1395
  %v1397 = vpop.f32.mrb[0].mxu0
  %v1398 = vpop.f32.mrb[0].mxu0
  %v1399 = vpop.f32.mrb[0].mxu0
  %1400 = vdwg.mxu0
  %1401 = vrot.lane.b32.xlu0 %v164, 64
  %v1402 = vpop.permute.xlu0 %1401
  %v1404 = vsel %vm208, %v1157, 0
  %v1407 = vsel %vm1165, %v1402, 0
  %1409 = vmatprep.subr.bf16.mxu0 0
  %1410 = vmatpush1.bf16.msra.mxu0 %v1407
  %1411 = vmatprep.subr.bf16.mxu0 0
  %1412 = vmatpush1.bf16.msra.mxu0 0
  %1413 = vmatprep.subr.bf16.mxu0 0
  %1414 = vmatpush1.bf16.msra.mxu0 0
  %1415 = vmatprep.subr.bf16.mxu0 0
  %1416 = vmatpush1.bf16.msra.mxu0 0
  %1417 = vmatprep.subr.bf16.mxu0 0
  %1418 = vmatpush1.bf16.msra.mxu0 0
  %1419 = vmatprep.subr.bf16.mxu0 0
  %1420 = vmatpush1.bf16.msra.mxu0 0
  %1421 = vmatprep.subr.bf16.mxu0 0
  %1422 = vmatpush1.bf16.msra.mxu0 0
  %1423 = vmatprep.subr.bf16.mxu0 0
  %1424 = vmatpush1.bf16.msra.mxu0 0
  %1425 = vmatprep.subr.bf16.mxu0 0
  %1426 = vmatpush1.bf16.msra.mxu0 0
  %1427 = vmatprep.subr.bf16.mxu0 0
  %1428 = vmatpush1.bf16.msra.mxu0 0
  %1429 = vmatprep.subr.bf16.mxu0 0
  %1430 = vmatpush1.bf16.msra.mxu0 0
  %1431 = vmatprep.subr.bf16.mxu0 0
  %1432 = vmatpush1.bf16.msra.mxu0 0
  %1433 = vmatprep.subr.bf16.mxu0 0
  %1434 = vmatpush1.bf16.msra.mxu0 0
  %1435 = vmatprep.subr.bf16.mxu0 0
  %1436 = vmatpush1.bf16.msra.mxu0 0
  %1437 = vmatprep.subr.bf16.mxu0 0
  %1438 = vmatpush1.bf16.msra.mxu0 0
  %1439 = vmatprep.subr.bf16.mxu0 0
  %1440 = vmatpush1.bf16.msra.mxu0 0
  %1441 = vmatprep.mubr.bf16.mxu0 0
  %1442 = vmatmul.mubr.bf16.gmra.mrb[0].mxu0 %v1404
  %v1443 = vpop.f32.mrb[0].mxu0
  %v1444 = vadd.f32 0.0, %v1443
  %v1445 = vpop.f32.mrb[0].mxu0
  %v1446 = vpop.f32.mrb[0].mxu0
  %v1447 = vpop.f32.mrb[0].mxu0
  %1448 = vdwg.mxu0
  %1449 = vrot.lane.b32.xlu0 %v165, 64
  %v1450 = vpop.permute.xlu0 %1449
  %v1452 = vsel %vm208, %v1158, 0
  %v1455 = vsel %vm1165, %v1450, 0
  %1457 = vmatprep.subr.bf16.mxu0 0
  %1458 = vmatpush1.bf16.msra.mxu0 %v1455
  %1459 = vmatprep.subr.bf16.mxu0 0
  %1460 = vmatpush1.bf16.msra.mxu0 0
  %1461 = vmatprep.subr.bf16.mxu0 0
  %1462 = vmatpush1.bf16.msra.mxu0 0
  %1463 = vmatprep.subr.bf16.mxu0 0
  %1464 = vmatpush1.bf16.msra.mxu0 0
  %1465 = vmatprep.subr.bf16.mxu0 0
  %1466 = vmatpush1.bf16.msra.mxu0 0
  %1467 = vmatprep.subr.bf16.mxu0 0
  %1468 = vmatpush1.bf16.msra.mxu0 0
  %1469 = vmatprep.subr.bf16.mxu0 0
  %1470 = vmatpush1.bf16.msra.mxu0 0
  %1471 = vmatprep.subr.bf16.mxu0 0
  %1472 = vmatpush1.bf16.msra.mxu0 0
  %1473 = vmatprep.subr.bf16.mxu0 0
  %1474 = vmatpush1.bf16.msra.mxu0 0
  %1475 = vmatprep.subr.bf16.mxu0 0
  %1476 = vmatpush1.bf16.msra.mxu0 0
  %1477 = vmatprep.subr.bf16.mxu0 0
  %1478 = vmatpush1.bf16.msra.mxu0 0
  %1479 = vmatprep.subr.bf16.mxu0 0
  %1480 = vmatpush1.bf16.msra.mxu0 0
  %1481 = vmatprep.subr.bf16.mxu0 0
  %1482 = vmatpush1.bf16.msra.mxu0 0
  %1483 = vmatprep.subr.bf16.mxu0 0
  %1484 = vmatpush1.bf16.msra.mxu0 0
  %1485 = vmatprep.subr.bf16.mxu0 0
  %1486 = vmatpush1.bf16.msra.mxu0 0
  %1487 = vmatprep.subr.bf16.mxu0 0
  %1488 = vmatpush1.bf16.msra.mxu0 0
  %1489 = vmatprep.mubr.bf16.mxu0 0
  %1490 = vmatmul.mubr.bf16.gmra.mrb[0].mxu0 %v1452
  %v1491 = vpop.f32.mrb[0].mxu0
  %v1492 = vadd.f32 0.0, %v1491
  %v1493 = vpop.f32.mrb[0].mxu0
  %v1494 = vpop.f32.mrb[0].mxu0
  %v1495 = vpop.f32.mrb[0].mxu0
  %1496 = vdwg.mxu0
  %1497 = vrot.lane.b32.xlu0 %v166, 64
  %v1498 = vpop.permute.xlu0 %1497
  %v1500 = vsel %vm208, %v1159, 0
  %v1503 = vsel %vm1165, %v1498, 0
  %1505 = vmatprep.subr.bf16.mxu0 0
  %1506 = vmatpush1.bf16.msra.mxu0 %v1503
  %1507 = vmatprep.subr.bf16.mxu0 0
  %1508 = vmatpush1.bf16.msra.mxu0 0
  %1509 = vmatprep.subr.bf16.mxu0 0
  %1510 = vmatpush1.bf16.msra.mxu0 0
  %1511 = vmatprep.subr.bf16.mxu0 0
  %1512 = vmatpush1.bf16.msra.mxu0 0
  %1513 = vmatprep.subr.bf16.mxu0 0
  %1514 = vmatpush1.bf16.msra.mxu0 0
  %1515 = vmatprep.subr.bf16.mxu0 0
  %1516 = vmatpush1.bf16.msra.mxu0 0
  %1517 = vmatprep.subr.bf16.mxu0 0
  %1518 = vmatpush1.bf16.msra.mxu0 0
  %1519 = vmatprep.subr.bf16.mxu0 0
  %1520 = vmatpush1.bf16.msra.mxu0 0
  %1521 = vmatprep.subr.bf16.mxu0 0
  %1522 = vmatpush1.bf16.msra.mxu0 0
  %1523 = vmatprep.subr.bf16.mxu0 0
  %1524 = vmatpush1.bf16.msra.mxu0 0
  %1525 = vmatprep.subr.bf16.mxu0 0
  %1526 = vmatpush1.bf16.msra.mxu0 0
  %1527 = vmatprep.subr.bf16.mxu0 0
  %1528 = vmatpush1.bf16.msra.mxu0 0
  %1529 = vmatprep.subr.bf16.mxu0 0
  %1530 = vmatpush1.bf16.msra.mxu0 0
  %1531 = vmatprep.subr.bf16.mxu0 0
  %1532 = vmatpush1.bf16.msra.mxu0 0
  %1533 = vmatprep.subr.bf16.mxu0 0
  %1534 = vmatpush1.bf16.msra.mxu0 0
  %1535 = vmatprep.subr.bf16.mxu0 0
  %1536 = vmatpush1.bf16.msra.mxu0 0
  %1537 = vmatprep.mubr.bf16.mxu0 0
  %1538 = vmatmul.mubr.bf16.gmra.mrb[0].mxu0 %v1500
  %v1539 = vpop.f32.mrb[0].mxu0
  %v1540 = vadd.f32 0.0, %v1539
  %v1541 = vpop.f32.mrb[0].mxu0
  %v1542 = vpop.f32.mrb[0].mxu0
  %v1543 = vpop.f32.mrb[0].mxu0
  %1544 = vdwg.mxu0
  %1547 = vrot.lane.b32.xlu0 %v1300, 8
  %v1548 = vpop.permute.xlu0 %1547
  %1549 = vrot.lane.b32.xlu0 %v1348, 8
  %v1550 = vpop.permute.xlu0 %1549
  %1555 = vrot.lane.b32.xlu0 %v1396, 16
  %v1556 = vpop.permute.xlu0 %1555
  %1557 = vrot.lane.b32.xlu0 %v1444, 16
  %v1558 = vpop.permute.xlu0 %1557
  %1563 = vrot.lane.b32.xlu0 %v1492, 24
  %v1564 = vpop.permute.xlu0 %1563
  %1565 = vrot.lane.b32.xlu0 %v1540, 24
  %v1566 = vpop.permute.xlu0 %1565
  %v1569 = vsel %vm208, %v1204, %v1548
  %v1570 = vsel %vm208, %v1252, %v1550
  %vm1571 = vcmask 130048
  %v1572 = vsel %vm1571, %v1569, %v1556
  %v1573 = vsel %vm1571, %v1570, %v1558
  %vm1574 = vcmask 195584
  %v1575 = vsel %vm1574, %v1572, %v1564
  %v1576 = vsel %vm1574, %v1573, %v1566
  %v1577 = vpack.c.bf16 %v1576, %v1575
  %v1578 = vld [vmem:[%s2] sm:$0xf]
  %v1579 = vld [vmem:[%s2 + $0x4] sm:$0xf]
  %v1580 = vld [vmem:[%s2 + $0x8] sm:$0xf]
  %v1581 = vld [vmem:[%s2 + $0xc] sm:$0xf]
  %v1586 = vunpack.c.l.b16 %v1578
  %v1587 = vunpack.c.l.b16 %v1579
  %v1588 = vunpack.c.l.b16 %v1580
  %v1589 = vunpack.c.l.b16 %v1581
  %v1590 = vpack.c.b16 %v1587, %v1586
  %v1591 = vpack.c.b16 %v1589, %v1588
  %v1595 = vsel %vm42, %v1577, 0
  %1597 = vmatprep.subr.bf16.mxu0 0
  %1598 = vmatpush1.bf16.msra.mxu0 %v1590
  %1599 = vmatprep.subr.bf16.mxu0 0
  %1600 = vmatpush1.bf16.msra.mxu0 %v1591
  %1601 = vmatprep.subr.bf16.mxu0 0
  %1602 = vmatpush1.bf16.msra.mxu0 0
  %1603 = vmatprep.subr.bf16.mxu0 0
  %1604 = vmatpush1.bf16.msra.mxu0 0
  %1605 = vmatprep.subr.bf16.mxu0 0
  %1606 = vmatpush1.bf16.msra.mxu0 0
  %1607 = vmatprep.subr.bf16.mxu0 0
  %1608 = vmatpush1.bf16.msra.mxu0 0
  %1609 = vmatprep.subr.bf16.mxu0 0
  %1610 = vmatpush1.bf16.msra.mxu0 0
  %1611 = vmatprep.subr.bf16.mxu0 0
  %1612 = vmatpush1.bf16.msra.mxu0 0
  %1613 = vmatprep.subr.bf16.mxu0 0
  %1614 = vmatpush1.bf16.msra.mxu0 0
  %1615 = vmatprep.subr.bf16.mxu0 0
  %1616 = vmatpush1.bf16.msra.mxu0 0
  %1617 = vmatprep.subr.bf16.mxu0 0
  %1618 = vmatpush1.bf16.msra.mxu0 0
  %1619 = vmatprep.subr.bf16.mxu0 0
  %1620 = vmatpush1.bf16.msra.mxu0 0
  %1621 = vmatprep.subr.bf16.mxu0 0
  %1622 = vmatpush1.bf16.msra.mxu0 0
  %1623 = vmatprep.subr.bf16.mxu0 0
  %1624 = vmatpush1.bf16.msra.mxu0 0
  %1625 = vmatprep.subr.bf16.mxu0 0
  %1626 = vmatpush1.bf16.msra.mxu0 0
  %1627 = vmatprep.subr.bf16.mxu0 0
  %1628 = vmatpush1.bf16.msra.mxu0 0
  %1629 = vmatprep.mubr.bf16.mxu0 0
  %1630 = vmatmul.mubr.bf16.gmra.mrb[0].mxu0 %v1595
  %v1631 = vpop.f32.mrb[0].mxu0
  %v1632 = vadd.f32 0.0, %v1631
  %v1633 = vpop.f32.mrb[0].mxu0
  %v1634 = vpop.f32.mrb[0].mxu0
  %v1635 = vadd.f32 0.0, %v1634
  %v1636 = vpop.f32.mrb[0].mxu0
  %1637 = vdwg.mxu0
  %v1638 = vadd.f32 %v21, %v1632
  %v1639 = vadd.f32 %v22, %v1635
  %v1640 = vsel %vm42, %v1638, 0.0
  %1641 = vadd.xlane.f32.xlu0 %v1640
  %v1642 = vpop.xlane.xlu0 %1641
  %v1643 = vsel %vm42, %v1639, 0.0
  %1644 = vadd.xlane.f32.xlu0 %v1643
  %v1645 = vpop.xlane.xlu0 %1644
  %v1646 = vrcp.pop 32.0
  %v1647 = vmul.f32 %v1642, %v1646
  %v1648 = vmul.f32 %v1645, %v1646
  %v1649 = vsub.f32 %v1638, %v1647
  %v1650 = vsub.f32 %v1639, %v1648
  %v1651 = vmul.f32 %v1649, %v1649
  %v1652 = vmul.f32 %v1650, %v1650
  %v1653 = vsel %vm42, %v1651, 0.0
  %1654 = vadd.xlane.f32.xlu0 %v1653
  %v1655 = vpop.xlane.xlu0 %1654
  %v1656 = vsel %vm42, %v1652, 0.0
  %1657 = vadd.xlane.f32.xlu0 %v1656
  %v1658 = vpop.xlane.xlu0 %1657
  %v1659 = vmul.f32 %v1655, %v1646
  %v1660 = vmul.f32 %v1658, %v1646
  %v1661 = vadd.f32 %v1659, 1e-05
  %v1662 = vadd.f32 %v1660, 1e-05
  %v1663 = vrsqrt.pop %v1661
  %v1664 = vrsqrt.pop %v1662
  %v1665 = vmul.f32 %v1649, %v1663
  %v1666 = vmul.f32 %v1650, %v1664
  %v1667 = vld [vmem:[%s4] sm:$0x1]
  %v1668 = vlaneseq
  %v1669 = vshrl.u32 %v1668, 7
  %v1670 = vsub.s32 0, %v1669
  %v1671 = vrot.slane %v1667, %v1670
  %v1672 = vmul.f32 %v1665, %v1671
  %v1673 = vmul.f32 %v1666, %v1671
  %v1674 = vld [vmem:[%s4 + $0x1] sm:$0x1]
  %v1675 = vlaneseq
  %v1676 = vshrl.u32 %v1675, 7
  %v1677 = vsub.s32 0, %v1676
  %v1678 = vrot.slane %v1674, %v1677
  %v1679 = vadd.f32 %v1672, %v1678
  %v1680 = vadd.f32 %v1673, %v1678
  %1681 = vst.msk [vmem:[%s5] sm:$0xff] %vm42, %v1679
  %1682 = vst.msk [vmem:[%s5 + $0x8] sm:$0xff] %vm42, %v1680
  // Predicated region
  $region22: #{rel_mha_pallas.1} parent=0 // pred_check
    _
  $region23: #{rel_mha_pallas.1} parent=0 // pred_check_branch
    %1684 = sbr.rel (0) target = $region25
  $region24: #{rel_mha_pallas.1} parent=0 // pred_region
    _
  $region25: #{rel_mha_pallas.1} parent=0 // pred_fallthru
    _
  // Predicated region
  $region26: #{rel_mha_pallas.1} parent=0 // pred_check
    _
  $region27: #{rel_mha_pallas.1} parent=0 // pred_check_branch
    %1686 = sbr.rel (0) target = $region29
  $region28: #{rel_mha_pallas.1} parent=0 // pred_region
    _
  $region29: #{rel_mha_pallas.1} parent=0 // pred_fallthru
    _

</llo_original>
